<compile_context>
chip_gen: v6e
topology: v6e:2x2x1
jax: 0.10.0
libtpu: 0.0.40
codegen_flags: <defaults>
</compile_context>

<pallas_src>
import functools
import math

import jax
import jax.numpy as jnp
from jax import lax
from jax.experimental import pallas as pl
from jax.experimental.pallas import tpu as pltpu


_MIB = 1024 * 1024


def _tpu_config():
    """VMEM-aware tile / limit config per TPU generation (review feedback)."""
    try:
        cap = pltpu.get_tpu_info().vmem_capacity_bytes
    except Exception:
        cap = 64 * _MIB  # conservative fallback (v7x-sized budget)
    if cap >= 100 * _MIB:
        # v5e / v6e: 128 MiB VMEM -> big tiles, generous scoped limit.
        return dict(vmem_limit=96 * _MIB,
                    lin_tiles=(512, 512, 1024),
                    attn_tiles=(512, 512))
    # v7x: 64 MiB VMEM -> keep tiles and scoped limit tight.
    return dict(vmem_limit=40 * _MIB,
                lin_tiles=(256, 256, 512),
                attn_tiles=(256, 256))


_CFG = _tpu_config()


def _pick_tile(dim, target, align):
    """Largest `align`-aligned tile <= target dividing `dim`, else the full
    dimension (full dims are always legal block dims)."""
    if dim <= target:
        return dim
    t = (target // align) * align
    while t >= align:
        if dim % t == 0:
            return t
        t -= align
    # TODO(synk): non-divisible dims fall back to the full dimension; pad the
    # operand instead if that would exceed the VMEM budget (tight on v7x).
    return dim


# ----------------------- tiled linear: x @ w_t + b -------------------------

def _linear_kernel(x_ref, w_ref, b_ref, o_ref, acc_ref):
    k = pl.program_id(2)

    @pl.when(k == 0)
    def _():
        acc_ref[...] = jnp.zeros(acc_ref.shape, acc_ref.dtype)

    acc_ref[...] += jnp.dot(x_ref[...], w_ref[...],
                            preferred_element_type=jnp.float32)

    @pl.when(k == pl.num_programs(2) - 1)
    def _():
        o_ref[...] = (acc_ref[...] + b_ref[...]).astype(o_ref.dtype)


def pallas_linear(x, w_t, b, out_dtype=jnp.float32, tile_targets=None):
    """x: (M, K) @ w_t: (K, N) + b: (N,) -> (M, N), f32 accumulation."""
    m, k = x.shape
    n = w_t.shape[1]
    tm_t, tn_t, tk_t = tile_targets or _CFG["lin_tiles"]
    tm = _pick_tile(m, tm_t, 16)     # bf16 packs 2 rows/sublane -> 16-aligned
    tn = _pick_tile(n, tn_t, 128)
    tk = _pick_tile(k, tk_t, 128)
    return pl.pallas_call(
        _linear_kernel,
        out_shape=jax.ShapeDtypeStruct((m, n), out_dtype),
        grid_spec=pltpu.PrefetchScalarGridSpec(
            num_scalar_prefetch=0,
            grid=(m // tm, n // tn, k // tk),
            in_specs=[
                pl.BlockSpec((tm, tk), lambda i, j, kk: (i, kk)),
                pl.BlockSpec((tk, tn), lambda i, j, kk: (kk, j)),
                pl.BlockSpec((1, tn), lambda i, j, kk: (0, j)),
            ],
            out_specs=pl.BlockSpec((tm, tn), lambda i, j, kk: (i, j)),
            scratch_shapes=[pltpu.VMEM((tm, tn), jnp.float32)],
        ),
        compiler_params=pltpu.CompilerParams(
            dimension_semantics=("parallel", "parallel", "arbitrary"),
            vmem_limit_bytes=_CFG["vmem_limit"]),
    )(x, w_t, b.reshape(1, n).astype(jnp.float32))


# -------------------- flash-style multi-head attention ----------------------

def _attention_kernel(q_ref, k_ref, v_ref, o_ref, m_sc, l_sc, acc_sc,
                      *, inv_scale):
    ki = pl.program_id(2)

    @pl.when(ki == 0)
    def _():
        m_sc[...] = jnp.full(m_sc.shape, -jnp.inf, dtype=m_sc.dtype)
        l_sc[...] = jnp.zeros(l_sc.shape, l_sc.dtype)
        acc_sc[...] = jnp.zeros(acc_sc.shape, acc_sc.dtype)

    q = q_ref[...]            # (H, tq, Dh) bf16 — head-leading, no head slicing
    k = k_ref[...]            # (H, tk, Dh)
    v = v_ref[...]            # (H, tk, Dh)

    # QK^T batched over heads, contracting on Dh (no explicit K transpose):
    # one batched MXU dot_general instead of H tiny 2-D dots.
    s = jnp.einsum("hqd,hkd->hqk", q, k,
                   preferred_element_type=jnp.float32)          # (H, tq, tk)

    m_prev = m_sc[...]                                          # (H, tq, 1)
    m_new = jnp.maximum(m_prev, jnp.max(s, axis=-1, keepdims=True))
    alpha = jnp.exp(m_prev - m_new)
    p = jnp.exp(s - m_new)
    l_sc[...] = alpha * l_sc[...] + jnp.sum(p, axis=-1, keepdims=True)
    # The tk-deep PV contraction carries the MXU work; batched over heads.
    pv = jnp.einsum("hqk,hkd->hqd", p.astype(v.dtype), v,
                    preferred_element_type=jnp.float32)         # (H, tq, Dh)
    acc_sc[...] = alpha * acc_sc[...] + pv
    m_sc[...] = m_new

    @pl.when(ki == pl.num_programs(2) - 1)
    def _():
        num_heads, _, dh = acc_sc.shape
        # Fused 'h q d -> q (h d)' head merge via per-head static lane-slice
        # stores into the lane-dense (tq, E) output (no concatenate epilogue).
        for hh in range(num_heads):          # static epilogue loop, tiny live set
            # softmax normalization via EUP reciprocal; the module's
            # POST-softmax 1/sqrt(E) scale is folded into the (tq, Dh) output.
            scale = pl.reciprocal(l_sc[hh], approx=True) * inv_scale
            o_ref[:, hh * dh:(hh + 1) * dh] = (
                acc_sc[hh] * scale).astype(o_ref.dtype)


def pallas_attention(qkv, embed_size, out_dtype=jnp.bfloat16,
                     tile_targets=None):
    """qkv: (3, B, H, N, Dh) with [q|k|v] on axis 0 -> (B, N, H*Dh)."""
    _, b, h, n, dh = qkv.shape
    tq_t, tk_t = tile_targets or _CFG["attn_tiles"]
    tq = _pick_tile(n, tq_t, 16)
    tk = _pick_tile(n, tk_t, 16)
    kern = functools.partial(
        _attention_kernel, inv_scale=1.0 / math.sqrt(float(embed_size)))

    # Same array passed three times; index_maps pick the q / k / v slice and
    # present head-leading (H, tile, Dh) blocks (free leading-axis views in
    # the kernel — no sublane relayout).
    q_spec = pl.BlockSpec((None, None, h, tq, dh),
                          lambda bi, qi, ki: (0, bi, 0, qi, 0))
    k_spec = pl.BlockSpec((None, None, h, tk, dh),
                          lambda bi, qi, ki: (1, bi, 0, ki, 0))
    v_spec = pl.BlockSpec((None, None, h, tk, dh),
                          lambda bi, qi, ki: (2, bi, 0, ki, 0))
    # TODO(synk): on v5e, add pipeline_mode=pl.Buffered(3) to k_spec/v_spec if
    # the profile shows exposed K/V DMA.

    return pl.pallas_call(
        kern,
        out_shape=jax.ShapeDtypeStruct((b, n, h * dh), out_dtype),
        grid_spec=pltpu.PrefetchScalarGridSpec(
            num_scalar_prefetch=0,
            grid=(b, n // tq, n // tk),        # reduction (kv) axis last
            in_specs=[q_spec, k_spec, v_spec],
            out_specs=pl.BlockSpec((None, tq, h * dh),
                                   lambda bi, qi, ki: (bi, qi, 0)),
            scratch_shapes=[
                # NOTE(review): trailing dim 1 lane-pads to 128 in VMEM —
                # negligible for f32 running stats, acknowledged.
                pltpu.VMEM((h, tq, 1), jnp.float32),   # running max
                pltpu.VMEM((h, tq, 1), jnp.float32),   # running denom
                pltpu.VMEM((h, tq, dh), jnp.float32),  # output accumulator
            ],
        ),
        compiler_params=pltpu.CompilerParams(
            # batch and q-tiles are parallel: both v7x TensorCores get cells
            # as long as B * (N // tq) >= 2 (true for the test shapes).
            dimension_semantics=("parallel", "parallel", "arbitrary"),
            vmem_limit_bytes=_CFG["vmem_limit"]),
    )(qkv, qkv, qkv)


# ------------------------------ glue / params ------------------------------

def init_params(key, embed_size):
    # torch.nn.Linear shapes: weight (out_features, in_features), bias (out,)
    k1, k2, k3, k4 = jax.random.split(key, 4)
    lim = 1.0 / math.sqrt(embed_size)
    return dict(
        w_qkv=jax.random.uniform(k1, (3 * embed_size, embed_size),
                                 jnp.float32, -lim, lim),
        b_qkv=jax.random.uniform(k2, (3 * embed_size,), jnp.float32, -lim, lim),
        w_proj=jax.random.uniform(k3, (embed_size, embed_size),
                                  jnp.float32, -lim, lim),
        b_proj=jax.random.uniform(k4, (embed_size,), jnp.float32, -lim, lim),
    )


def prepare_params(params, num_heads):
    """One-time (outside the jitted forward) weight permutation / transpose /
    bf16 cast — hoisted per review so no forward pays the extra HBM passes."""
    e = params["w_proj"].shape[0]
    dh = e // num_heads
    # einops 'b n (h d qkv) -> qkv b h n d' interprets fused output features
    # as (h, d, qkv); re-order rows to (qkv, h, d) so a free reshape of the
    # kernel output gives (..., 3, H, Dh) exactly matching the reference.
    w_qkv = params["w_qkv"].reshape(num_heads, dh, 3, e)
    w_qkv = jnp.transpose(w_qkv, (2, 0, 1, 3)).reshape(3 * e, e)
    b_qkv = params["b_qkv"].reshape(num_heads, dh, 3)
    b_qkv = jnp.transpose(b_qkv, (2, 0, 1)).reshape(3 * e)
    return dict(
        w_qkv_t=w_qkv.T.astype(jnp.bfloat16),               # (E, 3E)
        b_qkv=b_qkv.astype(jnp.float32),                     # (3E,)
        w_proj_t=params["w_proj"].T.astype(jnp.bfloat16),    # (E, E)
        b_proj=params["b_proj"].astype(jnp.float32),         # (E,)
    )


def multi_head_attention(x, prep, num_heads):
    b, n, e = x.shape
    dh = e // num_heads
    bf16 = jnp.bfloat16

    # Fused QKV projection: (B*N, E) @ (E, 3E) -> (B*N, 3E) in bf16; output
    # columns are ordered (qkv, head, dim) thanks to the pre-permuted weights.
    x_flat = x.reshape(b * n, e).astype(bf16)
    qkv = pallas_linear(x_flat, prep["w_qkv_t"], prep["b_qkv"], out_dtype=bf16)

    # Layout plumbing (one pass): (B*N, 3E) -> (3, B, H, N, Dh) so attention
    # blocks are head-leading (H, tile, Dh) and need no in-kernel head slicing.
    qkv = qkv.reshape(b, n, 3, num_heads, dh)
    qkv = jnp.transpose(qkv, (2, 0, 3, 1, 4))

    # Flash attention over all heads; output is already 'b n (h d)' lane-dense.
    o = pallas_attention(qkv, e, out_dtype=bf16)             # (B, N, E)

    out = pallas_linear(o.reshape(b * n, e), prep["w_proj_t"], prep["b_proj"],
                        out_dtype=jnp.float32)
    return out.reshape(b, n, e)


def reference(x, params, num_heads):
    b, n, e = x.shape
    dh = e // num_heads
    hp = jax.lax.Precision.HIGHEST
    qkv = jnp.einsum("bne,fe->bnf", x, params["w_qkv"],
                     precision=hp) + params["b_qkv"]
    qkv = qkv.reshape(b, n, num_heads, dh, 3)
    qkv = jnp.transpose(qkv, (4, 0, 2, 1, 3))            # (3, b, h, n, d)
    q, k, v = qkv[0], qkv[1], qkv[2]
    energy = jnp.einsum("bhqd,bhkd->bhqk", q, k, precision=hp)
    att = jax.nn.softmax(energy, axis=-1) / math.sqrt(float(e))
    out = jnp.einsum("bhal,bhlv->bhav", att, v, precision=hp)
    out = jnp.transpose(out, (0, 2, 1, 3)).reshape(b, n, e)
    out = jnp.einsum("bne,fe->bnf", out, params["w_proj"],
                     precision=hp) + params["b_proj"]
    return out


if __name__ == "__main__":
    embed_size, num_heads, dropout_prob = 32, 4, 0.0
    batch, seq = 2, 8

    key = jax.random.PRNGKey(0)
    kx, kp = jax.random.split(key)
    x = jax.random.normal(kx, (batch, seq, embed_size), jnp.float32)
    params = init_params(kp, embed_size)

    prep = prepare_params(params, num_heads)   # hoisted out of the jit path
    mha = jax.jit(multi_head_attention, static_argnums=2)
    out = jax.block_until_ready(mha(x, prep, num_heads))

    ref = reference(x, params, num_heads)
    assert out.shape == (batch, seq, embed_size)
    max_err = float(jnp.max(jnp.abs(out - ref)))
    # bf16 MXU inputs (f32 accumulation / softmax) -> slightly looser tolerance
    assert max_err < 5e-2, max_err

    print("KERNEL_OK")
</pallas_src>

<mosaic_0001>
module attributes {stable_mosaic.version = 11 : i64} {
  func.func @_linear_kernel(%arg0: i32, %arg1: i32, %arg2: i32, %arg3: memref<16x32xbf16, #tpu.memory_space<vmem>>, %arg4: memref<32x96xbf16, #tpu.memory_space<vmem>>, %arg5: memref<1x96xf32, #tpu.memory_space<vmem>>, %arg6: memref<16x96xbf16, #tpu.memory_space<vmem>>, %arg7: memref<16x96xf32, #tpu.memory_space<vmem>>) attributes {dimension_semantics = [#tpu.dimension_semantics<parallel>, #tpu.dimension_semantics<parallel>, #tpu.dimension_semantics<arbitrary>], iteration_bounds = array<i64: 1, 1, 1>, scalar_prefetch = 0 : i64, scratch_operands = 1 : i64, tpu.core_type = #tpu.core_type<tc>, window_params = [{transform_indices = @transform_0, window_bounds = array<i64: 16, 32>}, {transform_indices = @transform_1, window_bounds = array<i64: 32, 96>}, {transform_indices = @transform_2, window_bounds = array<i64: 1, 96>}, {transform_indices = @transform_3, window_bounds = array<i64: 16, 96>}]} {
    %c0_i32 = arith.constant 0 : i32
    %0 = arith.cmpi eq, %arg2, %c0_i32 : i32
    %1 = arith.extui %0 : i1 to i32
    %c0_i32_0 = arith.constant 0 : i32
    %2 = arith.cmpi ne, %1, %c0_i32_0 : i32
    scf.if %2 {
      %cst_10 = arith.constant 0.000000e+00 : f32
      %12 = vector.broadcast %cst_10 : f32 to vector<16x96xf32>
      %c0_11 = arith.constant 0 : index
      %c0_12 = arith.constant 0 : index
      %13 = vector.load %arg7[%c0_11, %c0_12] : memref<16x96xf32, #tpu.memory_space<vmem>>, vector<16x96xf32>
      tpu.vector_store %arg7[%c0_11, %c0_12], %12 {strides = array<i32>} : memref<16x96xf32, #tpu.memory_space<vmem>>, vector<16x96xf32>,
    } else {
    }
    %c0 = arith.constant 0 : index
    %c0_1 = arith.constant 0 : index
    %3 = vector.load %arg7[%c0, %c0_1] : memref<16x96xf32, #tpu.memory_space<vmem>>, vector<16x96xf32>
    %c0_2 = arith.constant 0 : index
    %c0_3 = arith.constant 0 : index
    %4 = vector.load %arg3[%c0_2, %c0_3] : memref<16x32xbf16, #tpu.memory_space<vmem>>, vector<16x32xbf16>
    %c0_4 = arith.constant 0 : index
    %c0_5 = arith.constant 0 : index
    %5 = vector.load %arg4[%c0_4, %c0_5] : memref<32x96xbf16, #tpu.memory_space<vmem>>, vector<32x96xbf16>
    %cst = arith.constant dense<0.000000e+00> : vector<16x96xf32>
    %6 = tpu.matmul %4, %5, %cst {dimension_numbers = #tpu.dot_dimension_numbers<[1], [0], [0], [1], [0, 0, 1, 1], [], []>} : vector<16x32xbf16>, vector<32x96xbf16>, vector<16x96xf32> -> vector<16x96xf32>
    %7 = arith.addf %3, %6 : vector<16x96xf32>
    %c0_6 = arith.constant 0 : index
    %c0_7 = arith.constant 0 : index
    %8 = vector.load %arg7[%c0_6, %c0_7] : memref<16x96xf32, #tpu.memory_space<vmem>>, vector<16x96xf32>
    tpu.vector_store %arg7[%c0_6, %c0_7], %7 {strides = array<i32>} : memref<16x96xf32, #tpu.memory_space<vmem>>, vector<16x96xf32>,
    %c0_i32_8 = arith.constant 0 : i32
    %9 = arith.cmpi eq, %arg2, %c0_i32_8 : i32
    %10 = arith.extui %9 : i1 to i32
    %c0_i32_9 = arith.constant 0 : i32
    %11 = arith.cmpi ne, %10, %c0_i32_9 : i32
    scf.if %11 {
      %c0_10 = arith.constant 0 : index
      %c0_11 = arith.constant 0 : index
      %12 = vector.load %arg7[%c0_10, %c0_11] : memref<16x96xf32, #tpu.memory_space<vmem>>, vector<16x96xf32>
      %c0_12 = arith.constant 0 : index
      %c0_13 = arith.constant 0 : index
      %13 = vector.load %arg5[%c0_12, %c0_13] : memref<1x96xf32, #tpu.memory_space<vmem>>, vector<1x96xf32>
      %14 = vector.broadcast %13 : vector<1x96xf32> to vector<16x96xf32>
      %15 = arith.addf %12, %14 : vector<16x96xf32>
      %16 = arith.truncf %15 : vector<16x96xf32> to vector<16x96xbf16>
      %c0_14 = arith.constant 0 : index
      %c0_15 = arith.constant 0 : index
      %17 = vector.load %arg6[%c0_14, %c0_15] : memref<16x96xbf16, #tpu.memory_space<vmem>>, vector<16x96xbf16>
      tpu.vector_store %arg6[%c0_14, %c0_15], %16 {strides = array<i32>} : memref<16x96xbf16, #tpu.memory_space<vmem>>, vector<16x96xbf16>,
    } else {
    }
    return
  }
  func.func @transform_0(%arg0: i32, %arg1: i32, %arg2: i32) -> (i32, i32) {
    %c0_i32 = arith.constant 0 : i32
    return %arg0, %arg2 : i32, i32
  }
  func.func @transform_1(%arg0: i32, %arg1: i32, %arg2: i32) -> (i32, i32) {
    %c0_i32 = arith.constant 0 : i32
    return %arg2, %arg1 : i32, i32
  }
  func.func @transform_2(%arg0: i32, %arg1: i32, %arg2: i32) -> (i32, i32) {
    %c0_i32 = arith.constant 0 : i32
    %c0_i32_0 = arith.constant 0 : i32
    return %c0_i32, %arg1 : i32, i32
  }
  func.func @transform_3(%arg0: i32, %arg1: i32, %arg2: i32) -> (i32, i32) {
    %c0_i32 = arith.constant 0 : i32
    return %arg0, %arg1 : i32, i32
  }
}

module attributes {stable_mosaic.version = 11 : i64} {
  func.func @_attention_kernel(%arg0: i32, %arg1: i32, %arg2: i32, %arg3: memref<1x1x4x8x8xbf16, #tpu.memory_space<vmem>>, %arg4: memref<1x1x4x8x8xbf16, #tpu.memory_space<vmem>>, %arg5: memref<1x1x4x8x8xbf16, #tpu.memory_space<vmem>>, %arg6: memref<1x8x32xbf16, #tpu.memory_space<vmem>>, %arg7: memref<4x8x1xf32, #tpu.memory_space<vmem>>, %arg8: memref<4x8x1xf32, #tpu.memory_space<vmem>>, %arg9: memref<4x8x8xf32, #tpu.memory_space<vmem>>) attributes {dimension_semantics = [#tpu.dimension_semantics<parallel>, #tpu.dimension_semantics<parallel>, #tpu.dimension_semantics<arbitrary>], iteration_bounds = array<i64: 2, 1, 1>, scalar_prefetch = 0 : i64, scratch_operands = 3 : i64, tpu.core_type = #tpu.core_type<tc>, window_params = [{transform_indices = @transform_0, window_bounds = array<i64: 1, 1, 4, 8, 8>}, {transform_indices = @transform_1, window_bounds = array<i64: 1, 1, 4, 8, 8>}, {transform_indices = @transform_2, window_bounds = array<i64: 1, 1, 4, 8, 8>}, {transform_indices = @transform_3, window_bounds = array<i64: 1, 8, 32>}]} {
    %c0_i32 = arith.constant 0 : i32
    %0 = arith.cmpi eq, %arg2, %c0_i32 : i32
    %1 = arith.extui %0 : i1 to i32
    %c0_i32_0 = arith.constant 0 : i32
    %2 = arith.cmpi ne, %1, %c0_i32_0 : i32
    scf.if %2 {
      %cst_38 = arith.constant 0xFF800000 : f32
      %36 = vector.broadcast %cst_38 : f32 to vector<4x8x1xf32>
      %c0_39 = arith.constant 0 : index
      %c0_40 = arith.constant 0 : index
      %c0_41 = arith.constant 0 : index
      %37 = vector.load %arg7[%c0_39, %c0_40, %c0_41] : memref<4x8x1xf32, #tpu.memory_space<vmem>>, vector<4x8x1xf32>
      tpu.vector_store %arg7[%c0_39, %c0_40, %c0_41], %36 {strides = array<i32>} : memref<4x8x1xf32, #tpu.memory_space<vmem>>, vector<4x8x1xf32>,
      %cst_42 = arith.constant 0.000000e+00 : f32
      %38 = vector.broadcast %cst_42 : f32 to vector<4x8x1xf32>
      %c0_43 = arith.constant 0 : index
      %c0_44 = arith.constant 0 : index
      %c0_45 = arith.constant 0 : index
      %39 = vector.load %arg8[%c0_43, %c0_44, %c0_45] : memref<4x8x1xf32, #tpu.memory_space<vmem>>, vector<4x8x1xf32>
      tpu.vector_store %arg8[%c0_43, %c0_44, %c0_45], %38 {strides = array<i32>} : memref<4x8x1xf32, #tpu.memory_space<vmem>>, vector<4x8x1xf32>,
      %cst_46 = arith.constant 0.000000e+00 : f32
      %40 = vector.broadcast %cst_46 : f32 to vector<4x8x8xf32>
      %c0_47 = arith.constant 0 : index
      %c0_48 = arith.constant 0 : index
      %c0_49 = arith.constant 0 : index
      %41 = vector.load %arg9[%c0_47, %c0_48, %c0_49] : memref<4x8x8xf32, #tpu.memory_space<vmem>>, vector<4x8x8xf32>
      tpu.vector_store %arg9[%c0_47, %c0_48, %c0_49], %40 {strides = array<i32>} : memref<4x8x8xf32, #tpu.memory_space<vmem>>, vector<4x8x8xf32>,
    } else {
    }
    %c0 = arith.constant 0 : index
    %c0_1 = arith.constant 0 : index
    %c0_2 = arith.constant 0 : index
    %c0_3 = arith.constant 0 : index
    %c0_4 = arith.constant 0 : index
    %3 = vector.load %arg3[%c0, %c0_1, %c0_2, %c0_3, %c0_4] : memref<1x1x4x8x8xbf16, #tpu.memory_space<vmem>>, vector<1x1x4x8x8xbf16>
    %4 = vector.shape_cast %3 : vector<1x1x4x8x8xbf16> to vector<4x8x8xbf16>
    %c0_5 = arith.constant 0 : index
    %c0_6 = arith.constant 0 : index
    %c0_7 = arith.constant 0 : index
    %c0_8 = arith.constant 0 : index
    %c0_9 = arith.constant 0 : index
    %5 = vector.load %arg4[%c0_5, %c0_6, %c0_7, %c0_8, %c0_9] : memref<1x1x4x8x8xbf16, #tpu.memory_space<vmem>>, vector<1x1x4x8x8xbf16>
    %6 = vector.shape_cast %5 : vector<1x1x4x8x8xbf16> to vector<4x8x8xbf16>
    %c0_10 = arith.constant 0 : index
    %c0_11 = arith.constant 0 : index
    %c0_12 = arith.constant 0 : index
    %c0_13 = arith.constant 0 : index
    %c0_14 = arith.constant 0 : index
    %7 = vector.load %arg5[%c0_10, %c0_11, %c0_12, %c0_13, %c0_14] : memref<1x1x4x8x8xbf16, #tpu.memory_space<vmem>>, vector<1x1x4x8x8xbf16>
    %8 = vector.shape_cast %7 : vector<1x1x4x8x8xbf16> to vector<4x8x8xbf16>
    "tpu.trace_start"() <{level = 10 : i32, message = "hqd,hkd->hqk"}> : () -> ()
    %cst = arith.constant dense<0.000000e+00> : vector<4x8x8xf32>
    %9 = tpu.matmul %4, %6, %cst {dimension_numbers = #tpu.dot_dimension_numbers<[2], [2], [1], [1], [0, 0, 0, 1, 1, 1], [0], [0]>} : vector<4x8x8xbf16>, vector<4x8x8xbf16>, vector<4x8x8xf32> -> vector<4x8x8xf32>
    "tpu.trace_stop"() : () -> ()
    %c0_15 = arith.constant 0 : index
    %c0_16 = arith.constant 0 : index
    %c0_17 = arith.constant 0 : index
    %10 = vector.load %arg7[%c0_15, %c0_16, %c0_17] : memref<4x8x1xf32, #tpu.memory_space<vmem>>, vector<4x8x1xf32>
    %cst_18 = arith.constant dense<0xFF800000> : vector<4x8xf32>
    %11 = vector.multi_reduction <maximumf>, %9, %cst_18 [2] : vector<4x8x8xf32> to vector<4x8xf32>
    %12 = vector.shape_cast %11 : vector<4x8xf32> to vector<4x8x1xf32>
    %13 = arith.maximumf %10, %12 : vector<4x8x1xf32>
    %14 = arith.subf %10, %13 : vector<4x8x1xf32>
    %15 = math.exp %14 : vector<4x8x1xf32>
    %16 = vector.broadcast %13 : vector<4x8x1xf32> to vector<4x8x8xf32>
    %17 = arith.subf %9, %16 : vector<4x8x8xf32>
    %18 = math.exp %17 : vector<4x8x8xf32>
    %c0_19 = arith.constant 0 : index
    %c0_20 = arith.constant 0 : index
    %c0_21 = arith.constant 0 : index
    %19 = vector.load %arg8[%c0_19, %c0_20, %c0_21] : memref<4x8x1xf32, #tpu.memory_space<vmem>>, vector<4x8x1xf32>
    %20 = arith.mulf %15, %19 : vector<4x8x1xf32>
    %cst_22 = arith.constant dense<0.000000e+00> : vector<4x8xf32>
    %21 = vector.multi_reduction <add>, %18, %cst_22 [2] : vector<4x8x8xf32> to vector<4x8xf32>
    %22 = vector.shape_cast %21 : vector<4x8xf32> to vector<4x8x1xf32>
    %23 = arith.addf %20, %22 : vector<4x8x1xf32>
    %c0_23 = arith.constant 0 : index
    %c0_24 = arith.constant 0 : index
    %c0_25 = arith.constant 0 : index
    %24 = vector.load %arg8[%c0_23, %c0_24, %c0_25] : memref<4x8x1xf32, #tpu.memory_space<vmem>>, vector<4x8x1xf32>
    tpu.vector_store %arg8[%c0_23, %c0_24, %c0_25], %23 {strides = array<i32>} : memref<4x8x1xf32, #tpu.memory_space<vmem>>, vector<4x8x1xf32>,
    %25 = arith.truncf %18 : vector<4x8x8xf32> to vector<4x8x8xbf16>
    "tpu.trace_start"() <{level = 10 : i32, message = "hqk,hkd->hqd"}> : () -> ()
    %cst_26 = arith.constant dense<0.000000e+00> : vector<4x8x8xf32>
    %26 = tpu.matmul %25, %8, %cst_26 {dimension_numbers = #tpu.dot_dimension_numbers<[2], [1], [1], [2], [0, 0, 0, 1, 1, 2], [0], [0]>} : vector<4x8x8xbf16>, vector<4x8x8xbf16>, vector<4x8x8xf32> -> vector<4x8x8xf32>
    "tpu.trace_stop"() : () -> ()
    %c0_27 = arith.constant 0 : index
    %c0_28 = arith.constant 0 : index
    %c0_29 = arith.constant 0 : index
    %27 = vector.load %arg9[%c0_27, %c0_28, %c0_29] : memref<4x8x8xf32, #tpu.memory_space<vmem>>, vector<4x8x8xf32>
    %28 = vector.broadcast %15 : vector<4x8x1xf32> to vector<4x8x8xf32>
    %29 = arith.mulf %28, %27 : vector<4x8x8xf32>
    %30 = arith.addf %29, %26 : vector<4x8x8xf32>
    %c0_30 = arith.constant 0 : index
    %c0_31 = arith.constant 0 : index
    %c0_32 = arith.constant 0 : index
    %31 = vector.load %arg9[%c0_30, %c0_31, %c0_32] : memref<4x8x8xf32, #tpu.memory_space<vmem>>, vector<4x8x8xf32>
    tpu.vector_store %arg9[%c0_30, %c0_31, %c0_32], %30 {strides = array<i32>} : memref<4x8x8xf32, #tpu.memory_space<vmem>>, vector<4x8x8xf32>,
    %c0_33 = arith.constant 0 : index
    %c0_34 = arith.constant 0 : index
    %c0_35 = arith.constant 0 : index
    %32 = vector.load %arg7[%c0_33, %c0_34, %c0_35] : memref<4x8x1xf32, #tpu.memory_space<vmem>>, vector<4x8x1xf32>
    tpu.vector_store %arg7[%c0_33, %c0_34, %c0_35], %13 {strides = array<i32>} : memref<4x8x1xf32, #tpu.memory_space<vmem>>, vector<4x8x1xf32>,
    %c0_i32_36 = arith.constant 0 : i32
    %33 = arith.cmpi eq, %arg2, %c0_i32_36 : i32
    %34 = arith.extui %33 : i1 to i32
    %c0_i32_37 = arith.constant 0 : i32
    %35 = arith.cmpi ne, %34, %c0_i32_37 : i32
    scf.if %35 {
      %c0_38 = arith.constant 0 : index
      %c0_39 = arith.constant 0 : index
      %c0_40 = arith.constant 0 : index
      %36 = vector.load %arg8[%c0_38, %c0_39, %c0_40] : memref<4x8x1xf32, #tpu.memory_space<vmem>>, vector<1x8x1xf32>
      %37 = vector.shape_cast %36 : vector<1x8x1xf32> to vector<8x1xf32>
      %38 = tpu.reciprocal %37 {approx = true} : vector<8x1xf32> -> vector<8x1xf32>
      %cst_41 = arith.constant 0.176776692 : f32
      %39 = vector.broadcast %cst_41 : f32 to vector<8x1xf32>
      %40 = arith.mulf %38, %39 : vector<8x1xf32>
      %c0_42 = arith.constant 0 : index
      %c0_43 = arith.constant 0 : index
      %c0_44 = arith.constant 0 : index
      %41 = vector.load %arg9[%c0_42, %c0_43, %c0_44] : memref<4x8x8xf32, #tpu.memory_space<vmem>>, vector<1x8x8xf32>
      %42 = vector.shape_cast %41 : vector<1x8x8xf32> to vector<8x8xf32>
      %43 = vector.broadcast %40 : vector<8x1xf32> to vector<8x8xf32>
      %44 = arith.mulf %42, %43 : vector<8x8xf32>
      %45 = arith.truncf %44 : vector<8x8xf32> to vector<8x8xbf16>
      %c0_45 = arith.constant 0 : index
      %c0_46 = arith.constant 0 : index
      %c0_47 = arith.constant 0 : index
      %46 = vector.load %arg6[%c0_45, %c0_46, %c0_47] : memref<1x8x32xbf16, #tpu.memory_space<vmem>>, vector<1x8x8xbf16>
      %47 = vector.shape_cast %46 : vector<1x8x8xbf16> to vector<8x8xbf16>
      %48 = vector.shape_cast %45 : vector<8x8xbf16> to vector<1x8x8xbf16>
      tpu.vector_store %arg6[%c0_45, %c0_46, %c0_47], %48 {strides = array<i32>} : memref<1x8x32xbf16, #tpu.memory_space<vmem>>, vector<1x8x8xbf16>,
      %c1 = arith.constant 1 : index
      %c0_48 = arith.constant 0 : index
      %c0_49 = arith.constant 0 : index
      %49 = vector.load %arg8[%c1, %c0_48, %c0_49] : memref<4x8x1xf32, #tpu.memory_space<vmem>>, vector<1x8x1xf32>
      %50 = vector.shape_cast %49 : vector<1x8x1xf32> to vector<8x1xf32>
      %51 = tpu.reciprocal %50 {approx = true} : vector<8x1xf32> -> vector<8x1xf32>
      %cst_50 = arith.constant 0.176776692 : f32
      %52 = vector.broadcast %cst_50 : f32 to vector<8x1xf32>
      %53 = arith.mulf %51, %52 : vector<8x1xf32>
      %c1_51 = arith.constant 1 : index
      %c0_52 = arith.constant 0 : index
      %c0_53 = arith.constant 0 : index
      %54 = vector.load %arg9[%c1_51, %c0_52, %c0_53] : memref<4x8x8xf32, #tpu.memory_space<vmem>>, vector<1x8x8xf32>
      %55 = vector.shape_cast %54 : vector<1x8x8xf32> to vector<8x8xf32>
      %56 = vector.broadcast %53 : vector<8x1xf32> to vector<8x8xf32>
      %57 = arith.mulf %55, %56 : vector<8x8xf32>
      %58 = arith.truncf %57 : vector<8x8xf32> to vector<8x8xbf16>
      %c0_54 = arith.constant 0 : index
      %c0_55 = arith.constant 0 : index
      %c8 = arith.constant 8 : index
      %59 = vector.load %arg6[%c0_54, %c0_55, %c8] : memref<1x8x32xbf16, #tpu.memory_space<vmem>>, vector<1x8x8xbf16>
      %60 = vector.shape_cast %59 : vector<1x8x8xbf16> to vector<8x8xbf16>
      %61 = vector.shape_cast %58 : vector<8x8xbf16> to vector<1x8x8xbf16>
      tpu.vector_store %arg6[%c0_54, %c0_55, %c8], %61 {strides = array<i32>} : memref<1x8x32xbf16, #tpu.memory_space<vmem>>, vector<1x8x8xbf16>,
      %c2 = arith.constant 2 : index
      %c0_56 = arith.constant 0 : index
      %c0_57 = arith.constant 0 : index
      %62 = vector.load %arg8[%c2, %c0_56, %c0_57] : memref<4x8x1xf32, #tpu.memory_space<vmem>>, vector<1x8x1xf32>
      %63 = vector.shape_cast %62 : vector<1x8x1xf32> to vector<8x1xf32>
      %64 = tpu.reciprocal %63 {approx = true} : vector<8x1xf32> -> vector<8x1xf32>
      %cst_58 = arith.constant 0.176776692 : f32
      %65 = vector.broadcast %cst_58 : f32 to vector<8x1xf32>
      %66 = arith.mulf %64, %65 : vector<8x1xf32>
      %c2_59 = arith.constant 2 : index
      %c0_60 = arith.constant 0 : index
      %c0_61 = arith.constant 0 : index
      %67 = vector.load %arg9[%c2_59, %c0_60, %c0_61] : memref<4x8x8xf32, #tpu.memory_space<vmem>>, vector<1x8x8xf32>
      %68 = vector.shape_cast %67 : vector<1x8x8xf32> to vector<8x8xf32>
      %69 = vector.broadcast %66 : vector<8x1xf32> to vector<8x8xf32>
      %70 = arith.mulf %68, %69 : vector<8x8xf32>
      %71 = arith.truncf %70 : vector<8x8xf32> to vector<8x8xbf16>
      %c0_62 = arith.constant 0 : index
      %c0_63 = arith.constant 0 : index
      %c16 = arith.constant 16 : index
      %72 = vector.load %arg6[%c0_62, %c0_63, %c16] : memref<1x8x32xbf16, #tpu.memory_space<vmem>>, vector<1x8x8xbf16>
      %73 = vector.shape_cast %72 : vector<1x8x8xbf16> to vector<8x8xbf16>
      %74 = vector.shape_cast %71 : vector<8x8xbf16> to vector<1x8x8xbf16>
      tpu.vector_store %arg6[%c0_62, %c0_63, %c16], %74 {strides = array<i32>} : memref<1x8x32xbf16, #tpu.memory_space<vmem>>, vector<1x8x8xbf16>,
      %c3 = arith.constant 3 : index
      %c0_64 = arith.constant 0 : index
      %c0_65 = arith.constant 0 : index
      %75 = vector.load %arg8[%c3, %c0_64, %c0_65] : memref<4x8x1xf32, #tpu.memory_space<vmem>>, vector<1x8x1xf32>
      %76 = vector.shape_cast %75 : vector<1x8x1xf32> to vector<8x1xf32>
      %77 = tpu.reciprocal %76 {approx = true} : vector<8x1xf32> -> vector<8x1xf32>
      %cst_66 = arith.constant 0.176776692 : f32
      %78 = vector.broadcast %cst_66 : f32 to vector<8x1xf32>
      %79 = arith.mulf %77, %78 : vector<8x1xf32>
      %c3_67 = arith.constant 3 : index
      %c0_68 = arith.constant 0 : index
      %c0_69 = arith.constant 0 : index
      %80 = vector.load %arg9[%c3_67, %c0_68, %c0_69] : memref<4x8x8xf32, #tpu.memory_space<vmem>>, vector<1x8x8xf32>
      %81 = vector.shape_cast %80 : vector<1x8x8xf32> to vector<8x8xf32>
      %82 = vector.broadcast %79 : vector<8x1xf32> to vector<8x8xf32>
      %83 = arith.mulf %81, %82 : vector<8x8xf32>
      %84 = arith.truncf %83 : vector<8x8xf32> to vector<8x8xbf16>
      %c0_70 = arith.constant 0 : index
      %c0_71 = arith.constant 0 : index
      %c24 = arith.constant 24 : index
      %85 = vector.load %arg6[%c0_70, %c0_71, %c24] : memref<1x8x32xbf16, #tpu.memory_space<vmem>>, vector<1x8x8xbf16>
      %86 = vector.shape_cast %85 : vector<1x8x8xbf16> to vector<8x8xbf16>
      %87 = vector.shape_cast %84 : vector<8x8xbf16> to vector<1x8x8xbf16>
      tpu.vector_store %arg6[%c0_70, %c0_71, %c24], %87 {strides = array<i32>} : memref<1x8x32xbf16, #tpu.memory_space<vmem>>, vector<1x8x8xbf16>,
    } else {
    }
    return
  }
  func.func @transform_0(%arg0: i32, %arg1: i32, %arg2: i32) -> (i32, i32, i32, i32, i32) {
    %c0_i32 = arith.constant 0 : i32
    %c0_i32_0 = arith.constant 0 : i32
    %c0_i32_1 = arith.constant 0 : i32
    %c0_i32_2 = arith.constant 0 : i32
    return %c0_i32, %arg0, %c0_i32_0, %arg1, %c0_i32_1 : i32, i32, i32, i32, i32
  }
  func.func @transform_1(%arg0: i32, %arg1: i32, %arg2: i32) -> (i32, i32, i32, i32, i32) {
    %c1_i32 = arith.constant 1 : i32
    %c0_i32 = arith.constant 0 : i32
    %c0_i32_0 = arith.constant 0 : i32
    %c0_i32_1 = arith.constant 0 : i32
    return %c1_i32, %arg0, %c0_i32, %arg2, %c0_i32_0 : i32, i32, i32, i32, i32
  }
  func.func @transform_2(%arg0: i32, %arg1: i32, %arg2: i32) -> (i32, i32, i32, i32, i32) {
    %c2_i32 = arith.constant 2 : i32
    %c0_i32 = arith.constant 0 : i32
    %c0_i32_0 = arith.constant 0 : i32
    %c0_i32_1 = arith.constant 0 : i32
    return %c2_i32, %arg0, %c0_i32, %arg2, %c0_i32_0 : i32, i32, i32, i32, i32
  }
  func.func @transform_3(%arg0: i32, %arg1: i32, %arg2: i32) -> (i32, i32, i32) {
    %c0_i32 = arith.constant 0 : i32
    %c0_i32_0 = arith.constant 0 : i32
    return %arg0, %arg1, %c0_i32 : i32, i32, i32
  }
}

module attributes {stable_mosaic.version = 11 : i64} {
  func.func @_linear_kernel(%arg0: i32, %arg1: i32, %arg2: i32, %arg3: memref<16x32xbf16, #tpu.memory_space<vmem>>, %arg4: memref<32x32xbf16, #tpu.memory_space<vmem>>, %arg5: memref<1x32xf32, #tpu.memory_space<vmem>>, %arg6: memref<16x32xf32, #tpu.memory_space<vmem>>, %arg7: memref<16x32xf32, #tpu.memory_space<vmem>>) attributes {dimension_semantics = [#tpu.dimension_semantics<parallel>, #tpu.dimension_semantics<parallel>, #tpu.dimension_semantics<arbitrary>], iteration_bounds = array<i64: 1, 1, 1>, scalar_prefetch = 0 : i64, scratch_operands = 1 : i64, tpu.core_type = #tpu.core_type<tc>, window_params = [{transform_indices = @transform_0, window_bounds = array<i64: 16, 32>}, {transform_indices = @transform_1, window_bounds = array<i64: 32, 32>}, {transform_indices = @transform_2, window_bounds = array<i64: 1, 32>}, {transform_indices = @transform_3, window_bounds = array<i64: 16, 32>}]} {
    %c0_i32 = arith.constant 0 : i32
    %0 = arith.cmpi eq, %arg2, %c0_i32 : i32
    %1 = arith.extui %0 : i1 to i32
    %c0_i32_0 = arith.constant 0 : i32
    %2 = arith.cmpi ne, %1, %c0_i32_0 : i32
    scf.if %2 {
      %cst_10 = arith.constant 0.000000e+00 : f32
      %12 = vector.broadcast %cst_10 : f32 to vector<16x32xf32>
      %c0_11 = arith.constant 0 : index
      %c0_12 = arith.constant 0 : index
      %13 = vector.load %arg7[%c0_11, %c0_12] : memref<16x32xf32, #tpu.memory_space<vmem>>, vector<16x32xf32>
      tpu.vector_store %arg7[%c0_11, %c0_12], %12 {strides = array<i32>} : memref<16x32xf32, #tpu.memory_space<vmem>>, vector<16x32xf32>,
    } else {
    }
    %c0 = arith.constant 0 : index
    %c0_1 = arith.constant 0 : index
    %3 = vector.load %arg7[%c0, %c0_1] : memref<16x32xf32, #tpu.memory_space<vmem>>, vector<16x32xf32>
    %c0_2 = arith.constant 0 : index
    %c0_3 = arith.constant 0 : index
    %4 = vector.load %arg3[%c0_2, %c0_3] : memref<16x32xbf16, #tpu.memory_space<vmem>>, vector<16x32xbf16>
    %c0_4 = arith.constant 0 : index
    %c0_5 = arith.constant 0 : index
    %5 = vector.load %arg4[%c0_4, %c0_5] : memref<32x32xbf16, #tpu.memory_space<vmem>>, vector<32x32xbf16>
    %cst = arith.constant dense<0.000000e+00> : vector<16x32xf32>
    %6 = tpu.matmul %4, %5, %cst {dimension_numbers = #tpu.dot_dimension_numbers<[1], [0], [0], [1], [0, 0, 1, 1], [], []>} : vector<16x32xbf16>, vector<32x32xbf16>, vector<16x32xf32> -> vector<16x32xf32>
    %7 = arith.addf %3, %6 : vector<16x32xf32>
    %c0_6 = arith.constant 0 : index
    %c0_7 = arith.constant 0 : index
    %8 = vector.load %arg7[%c0_6, %c0_7] : memref<16x32xf32, #tpu.memory_space<vmem>>, vector<16x32xf32>
    tpu.vector_store %arg7[%c0_6, %c0_7], %7 {strides = array<i32>} : memref<16x32xf32, #tpu.memory_space<vmem>>, vector<16x32xf32>,
    %c0_i32_8 = arith.constant 0 : i32
    %9 = arith.cmpi eq, %arg2, %c0_i32_8 : i32
    %10 = arith.extui %9 : i1 to i32
    %c0_i32_9 = arith.constant 0 : i32
    %11 = arith.cmpi ne, %10, %c0_i32_9 : i32
    scf.if %11 {
      %c0_10 = arith.constant 0 : index
      %c0_11 = arith.constant 0 : index
      %12 = vector.load %arg7[%c0_10, %c0_11] : memref<16x32xf32, #tpu.memory_space<vmem>>, vector<16x32xf32>
      %c0_12 = arith.constant 0 : index
      %c0_13 = arith.constant 0 : index
      %13 = vector.load %arg5[%c0_12, %c0_13] : memref<1x32xf32, #tpu.memory_space<vmem>>, vector<1x32xf32>
      %14 = vector.broadcast %13 : vector<1x32xf32> to vector<16x32xf32>
      %15 = arith.addf %12, %14 : vector<16x32xf32>
      %c0_14 = arith.constant 0 : index
      %c0_15 = arith.constant 0 : index
      %16 = vector.load %arg6[%c0_14, %c0_15] : memref<16x32xf32, #tpu.memory_space<vmem>>, vector<16x32xf32>
      tpu.vector_store %arg6[%c0_14, %c0_15], %15 {strides = array<i32>} : memref<16x32xf32, #tpu.memory_space<vmem>>, vector<16x32xf32>,
    } else {
    }
    return
  }
  func.func @transform_0(%arg0: i32, %arg1: i32, %arg2: i32) -> (i32, i32) {
    %c0_i32 = arith.constant 0 : i32
    return %arg0, %arg2 : i32, i32
  }
  func.func @transform_1(%arg0: i32, %arg1: i32, %arg2: i32) -> (i32, i32) {
    %c0_i32 = arith.constant 0 : i32
    return %arg2, %arg1 : i32, i32
  }
  func.func @transform_2(%arg0: i32, %arg1: i32, %arg2: i32) -> (i32, i32) {
    %c0_i32 = arith.constant 0 : i32
    %c0_i32_0 = arith.constant 0 : i32
    return %c0_i32, %arg1 : i32, i32
  }
  func.func @transform_3(%arg0: i32, %arg1: i32, %arg2: i32) -> (i32, i32) {
    %c0_i32 = arith.constant 0 : i32
    return %arg0, %arg1 : i32, i32
  }
}

</mosaic_0001>

<llo_original>
// kernel: multi_head_attention.3
$region0: #{multi_head_attention.3}
  #allocation0 [shape = 'u32[]', space=smem, size = 0x4, offset = 0x4, fixed_abs, tag = 'smem constant byte address 0x4 - core index']
  #allocation1 [shape = 'u32[144,128]{1,0:T(1,128)}', space=vmem, size = 0x12000, scoped, tag = 'internal scratch']
  #allocation2 [shape = 'f32[16,96]{1,0:T(8,128)}', space=vmem, size = 0x2000, scoped, tag = 'scratch operand']
  %s0 = inlined_call_operand.vmem [shape: bf16[16,32], index: 0, kind: input, shape index: {}]
  %s1 = inlined_call_operand.vmem [shape: bf16[32,96], index: 1, kind: input, shape index: {}]
  %s2 = inlined_call_operand.vmem [shape: f32[1,96], index: 2, kind: input, shape index: {}]
  %s3 = inlined_call_operand.vmem [shape: bf16[16,96], index: 3, kind: output, shape index: {}]
  %s4 = sld [smem:[#allocation0]]
  $region30: #{multi_head_attention.3} parent=0
    _
  %s6 = ssub.s32 1, %s4
  %s7 = scalar_select 0, %s6, %s4
  // Predicated region
  $region2: #{multi_head_attention.3} parent=0 // pred_check
    _
  $region3: #{multi_head_attention.3} parent=0 // pred_check_branch
    %9 = sbr.rel (0) target = $region5
  $region4: #{multi_head_attention.3} parent=0 // pred_region
    _
  $region5: #{multi_head_attention.3} parent=0 // pred_fallthru
    _
  // Predicated region
  $region6: #{multi_head_attention.3} parent=0 // pred_check
    _
  $region7: #{multi_head_attention.3} parent=0 // pred_check_branch
    %11 = sbr.rel (0) target = $region9
  $region8: #{multi_head_attention.3} parent=0 // pred_region
    _
  $region9: #{multi_head_attention.3} parent=0 // pred_fallthru
    _
  // Predicated region
  $region10: #{multi_head_attention.3} parent=0 // pred_check
    _
  $region11: #{multi_head_attention.3} parent=0 // pred_check_branch
    %13 = sbr.rel (0) target = $region13
  $region12: #{multi_head_attention.3} parent=0 // pred_region
    _
  $region13: #{multi_head_attention.3} parent=0 // pred_fallthru
    _
  %p15 = scmp.eq.s32.totalorder 0, 0
  // Predicated region
  $region14: #{multi_head_attention.3} parent=0 // pred_check
    %p16 = pneg %p15
  $region15: #{multi_head_attention.3} parent=0 // pred_check_branch
    %18 = sbr.rel (%p16) target = $region17
  $region16: #{multi_head_attention.3} parent=0 // pred_region
    %vm19 = vcmask 785408
    %20 = vst.msk [vmem:[#allocation2] sm:$0xff] %vm19, 0.0
    %21 = vst.msk [vmem:[#allocation2 + $0x8] sm:$0xff] %vm19, 0.0
  $region17: #{multi_head_attention.3} parent=0 // pred_fallthru
    _
  %v22 = vld [vmem:[#allocation2] sm:$0xff]
  %v23 = vld [vmem:[#allocation2 + $0x8] sm:$0xff]
  %v24 = vld [vmem:[%s0] sm:$0xf]
  %v25 = vld [vmem:[%s0 + $0x4] sm:$0xf]
  %v26 = vld [vmem:[%s1] sm:$0xf]
  %v27 = vld [vmem:[%s1 + $0x4] sm:$0xf]
  %v28 = vld [vmem:[%s1 + $0x8] sm:$0xf]
  %v29 = vld [vmem:[%s1 + $0xc] sm:$0xf]
  %v32 = vunpack.c.l.b16 %v24
  %v33 = vunpack.c.l.b16 %v25
  %v34 = vpack.c.b16 %v33, %v32
  %v39 = vunpack.c.l.b16 %v26
  %v40 = vunpack.c.l.b16 %v27
  %v41 = vunpack.c.l.b16 %v28
  %v42 = vunpack.c.l.b16 %v29
  %v43 = vpack.c.b16 %v40, %v39
  %v44 = vpack.c.b16 %v42, %v41
  %vm47 = vcmask 261120
  %v49 = vsel %vm47, %v34, 0
  %51 = vmatprep.subr.bf16.mxu0 0
  %52 = vmatpush1.bf16.msra.mxu0 0
  %53 = vmatprep.subr.bf16.mxu0 0
  %54 = vmatpush1.bf16.msra.mxu0 0
  %55 = vmatprep.subr.bf16.mxu0 0
  %56 = vmatpush1.bf16.msra.mxu0 0
  %57 = vmatprep.subr.bf16.mxu0 0
  %58 = vmatpush1.bf16.msra.mxu0 0
  %59 = vmatprep.subr.bf16.mxu0 0
  %60 = vmatpush1.bf16.msra.mxu0 0
  %61 = vmatprep.subr.bf16.mxu0 0
  %62 = vmatpush1.bf16.msra.mxu0 0
  %63 = vmatprep.subr.bf16.mxu0 0
  %64 = vmatpush1.bf16.msra.mxu0 %v44
  %65 = vmatprep.subr.bf16.mxu0 0
  %66 = vmatpush1.bf16.msra.mxu0 %v43
  %67 = vmatprep.subr.bf16.mxu0 0
  %68 = vmatpush2.bf16.msra.mxu0 0
  %69 = vmatprep.subr.bf16.mxu0 0
  %70 = vmatpush2.bf16.msra.mxu0 0
  %71 = vmatprep.subr.bf16.mxu0 0
  %72 = vmatpush2.bf16.msra.mxu0 0
  %73 = vmatprep.subr.bf16.mxu0 0
  %74 = vmatpush2.bf16.msra.mxu0 0
  %75 = vmatprep.subr.bf16.mxu0 0
  %76 = vmatpush2.bf16.msra.mxu0 0
  %77 = vmatprep.subr.bf16.mxu0 0
  %78 = vmatpush2.bf16.msra.mxu0 0
  %79 = vmatprep.subr.bf16.mxu0 0
  %80 = vmatpush2.bf16.msra.mxu0 0
  %81 = vmatprep.subr.bf16.mxu0 0
  %82 = vmatpush2.bf16.msra.mxu0 0
  %83 = vmatprep.mubr.bf16.mxu0 0
  %84 = vmatmul.mubr.bf16.gmra.mxu0 %v49
  %v85 = vpop.f32.mrf.mxu0
  %v86 = vadd.f32 0.0, %v85
  %v87 = vpop.f32.mrf.mxu0
  %v88 = vpop.f32.mrf.mxu0
  %v89 = vadd.f32 0.0, %v88
  %v90 = vpop.f32.mrf.mxu0
  %91 = vdwg.mxu0
  %v92 = vadd.f32 %v22, %v86
  %v93 = vadd.f32 %v23, %v89
  %vm94 = vcmask 785408
  %95 = vst.msk [vmem:[#allocation2] sm:$0xff] %vm94, %v92
  %96 = vst.msk [vmem:[#allocation2 + $0x8] sm:$0xff] %vm94, %v93
  // Predicated region
  $region18: #{multi_head_attention.3} parent=0 // pred_check
    %p97 = pneg %p15
  $region19: #{multi_head_attention.3} parent=0 // pred_check_branch
    %99 = sbr.rel (%p97) target = $region21
  $region20: #{multi_head_attention.3} parent=0 // pred_region
    %v100 = vld [vmem:[#allocation2] sm:$0xff]
    %v101 = vld [vmem:[#allocation2 + $0x8] sm:$0xff]
    %v102 = vld [vmem:[%s2] sm:$0x1]
    %v104 = vlaneseq
    %v105 = vshrl.u32 %v104, 7
    %v106 = vsub.s32 0, %v105
    %v107 = vrot.slane %v102, %v106
    %v109 = vadd.f32 %v100, %v107
    %v110 = vadd.f32 %v101, %v107
    %v111 = vpack.c.bf16 %v110, %v109
    %v113 = vunpack.c.l.b16 %v111
    %v114 = vunpack.c.h.b16 %v111
    %v115 = vpack.c.b16 %v113, %v113
    %v116 = vpack.c.b16 %v114, %v114
    %vm119 = vcmask 781312
    %120 = vst.msk [vmem:[%s3] sm:$0xf] %vm119, %v115
    %121 = vst.msk [vmem:[%s3 + $0x4] sm:$0xf] %vm119, %v116
  $region21: #{multi_head_attention.3} parent=0 // pred_fallthru
    _
  // Predicated region
  $region22: #{multi_head_attention.3} parent=0 // pred_check
    _
  $region23: #{multi_head_attention.3} parent=0 // pred_check_branch
    %123 = sbr.rel (0) target = $region25
  $region24: #{multi_head_attention.3} parent=0 // pred_region
    _
  $region25: #{multi_head_attention.3} parent=0 // pred_fallthru
    _
  // Predicated region
  $region26: #{multi_head_attention.3} parent=0 // pred_check
    _
  $region27: #{multi_head_attention.3} parent=0 // pred_check_branch
    %125 = sbr.rel (0) target = $region29
  $region28: #{multi_head_attention.3} parent=0 // pred_region
    _
  $region29: #{multi_head_attention.3} parent=0 // pred_fallthru
    _

// kernel: multi_head_attention.5
$region0: #{multi_head_attention.5}
  #allocation0 [shape = 'u32[]', space=smem, size = 0x4, offset = 0x4, fixed_abs, tag = 'smem constant byte address 0x4 - core index']
  #allocation1 [shape = 'u32[144,128]{1,0:T(1,128)}', space=vmem, size = 0x12000, scoped, tag = 'internal scratch']
  #allocation2 [shape = 'f32[16,32]{1,0:T(8,128)}', space=vmem, size = 0x2000, scoped, tag = 'scratch operand']
  %s0 = inlined_call_operand.vmem [shape: bf16[16,32], index: 0, kind: input, shape index: {}]
  %s1 = inlined_call_operand.vmem [shape: bf16[32,32], index: 1, kind: input, shape index: {}]
  %s2 = inlined_call_operand.vmem [shape: f32[1,32], index: 2, kind: input, shape index: {}]
  %s3 = inlined_call_operand.hbm [shape: f32[16,32], index: 3, kind: output, shape index: {}]
  %s4 = sld [smem:[#allocation0]]
  $region30: #{multi_head_attention.5} parent=0
    _
  %s6 = ssub.s32 1, %s4
  %s7 = scalar_select 0, %s6, %s4
  $region1: #{multi_head_attention.5} parent=0
    #allocation3 [shape = 'u8[8192]{0}', space=vmem, size = 0x2000, scoped, tag = 'output window, operand 0, single buffered']
    #allocation4 [shape = 's32[1]{0}', space=sflag, size = 0x4, scoped, tag = 'scoped memory for multi_head_attention.5']
    %8 = vsyncpa [#allocation4], 0
    // Predicated region
    $region2: #{multi_head_attention.5} parent=1 // pred_check
      _
    $region3: #{multi_head_attention.5} parent=1 // pred_check_branch
      %10 = sbr.rel (0) target = $region5
    $region4: #{multi_head_attention.5} parent=1 // pred_region
      _
    $region5: #{multi_head_attention.5} parent=1 // pred_fallthru
      _
    // Predicated region
    $region6: #{multi_head_attention.5} parent=1 // pred_check
      _
    $region7: #{multi_head_attention.5} parent=1 // pred_check_branch
      %12 = sbr.rel (0) target = $region9
    $region8: #{multi_head_attention.5} parent=1 // pred_region
      _
    $region9: #{multi_head_attention.5} parent=1 // pred_fallthru
      _
    // Predicated region
    $region10: #{multi_head_attention.5} parent=1 // pred_check
      _
    $region11: #{multi_head_attention.5} parent=1 // pred_check_branch
      %14 = sbr.rel (0) target = $region13
    $region12: #{multi_head_attention.5} parent=1 // pred_region
      _
    $region13: #{multi_head_attention.5} parent=1 // pred_fallthru
      _
    %p16 = scmp.eq.s32.totalorder 0, 0
    // Predicated region
    $region14: #{multi_head_attention.5} parent=1 // pred_check
      %p17 = pneg %p16
    $region15: #{multi_head_attention.5} parent=1 // pred_check_branch
      %19 = sbr.rel (%p17) target = $region17
    $region16: #{multi_head_attention.5} parent=1 // pred_region
      %vm20 = vcmask 261120
      %21 = vst.msk [vmem:[#allocation2] sm:$0xff] %vm20, 0.0
      %22 = vst.msk [vmem:[#allocation2 + $0x8] sm:$0xff] %vm20, 0.0
    $region17: #{multi_head_attention.5} parent=1 // pred_fallthru
      _
    %v23 = vld [vmem:[#allocation2] sm:$0xff]
    %v24 = vld [vmem:[#allocation2 + $0x8] sm:$0xff]
    %v25 = vld [vmem:[%s0] sm:$0xf]
    %v26 = vld [vmem:[%s0 + $0x4] sm:$0xf]
    %v27 = vld [vmem:[%s1] sm:$0xf]
    %v28 = vld [vmem:[%s1 + $0x4] sm:$0xf]
    %v29 = vld [vmem:[%s1 + $0x8] sm:$0xf]
    %v30 = vld [vmem:[%s1 + $0xc] sm:$0xf]
    %v33 = vunpack.c.l.b16 %v25
    %v34 = vunpack.c.l.b16 %v26
    %v35 = vpack.c.b16 %v34, %v33
    %v40 = vunpack.c.l.b16 %v27
    %v41 = vunpack.c.l.b16 %v28
    %v42 = vunpack.c.l.b16 %v29
    %v43 = vunpack.c.l.b16 %v30
    %v44 = vpack.c.b16 %v41, %v40
    %v45 = vpack.c.b16 %v43, %v42
    %vm48 = vcmask 261120
    %v50 = vsel %vm48, %v35, 0
    %52 = vmatprep.subr.bf16.mxu0 0
    %53 = vmatpush1.bf16.msra.mxu0 0
    %54 = vmatprep.subr.bf16.mxu0 0
    %55 = vmatpush1.bf16.msra.mxu0 0
    %56 = vmatprep.subr.bf16.mxu0 0
    %57 = vmatpush1.bf16.msra.mxu0 0
    %58 = vmatprep.subr.bf16.mxu0 0
    %59 = vmatpush1.bf16.msra.mxu0 0
    %60 = vmatprep.subr.bf16.mxu0 0
    %61 = vmatpush1.bf16.msra.mxu0 0
    %62 = vmatprep.subr.bf16.mxu0 0
    %63 = vmatpush1.bf16.msra.mxu0 0
    %64 = vmatprep.subr.bf16.mxu0 0
    %65 = vmatpush1.bf16.msra.mxu0 %v45
    %66 = vmatprep.subr.bf16.mxu0 0
    %67 = vmatpush1.bf16.msra.mxu0 %v44
    %68 = vmatprep.subr.bf16.mxu0 0
    %69 = vmatpush2.bf16.msra.mxu0 0
    %70 = vmatprep.subr.bf16.mxu0 0
    %71 = vmatpush2.bf16.msra.mxu0 0
    %72 = vmatprep.subr.bf16.mxu0 0
    %73 = vmatpush2.bf16.msra.mxu0 0
    %74 = vmatprep.subr.bf16.mxu0 0
    %75 = vmatpush2.bf16.msra.mxu0 0
    %76 = vmatprep.subr.bf16.mxu0 0
    %77 = vmatpush2.bf16.msra.mxu0 0
    %78 = vmatprep.subr.bf16.mxu0 0
    %79 = vmatpush2.bf16.msra.mxu0 0
    %80 = vmatprep.subr.bf16.mxu0 0
    %81 = vmatpush2.bf16.msra.mxu0 0
    %82 = vmatprep.subr.bf16.mxu0 0
    %83 = vmatpush2.bf16.msra.mxu0 0
    %84 = vmatprep.mubr.bf16.mxu0 0
    %85 = vmatmul.mubr.bf16.gmra.mxu0 %v50
    %v86 = vpop.f32.mrf.mxu0
    %v87 = vadd.f32 0.0, %v86
    %v88 = vpop.f32.mrf.mxu0
    %v89 = vpop.f32.mrf.mxu0
    %v90 = vadd.f32 0.0, %v89
    %v91 = vpop.f32.mrf.mxu0
    %92 = vdwg.mxu0
    %v93 = vadd.f32 %v23, %v87
    %v94 = vadd.f32 %v24, %v90
    %95 = vst.msk [vmem:[#allocation2] sm:$0xff] %vm48, %v93
    %96 = vst.msk [vmem:[#allocation2 + $0x8] sm:$0xff] %vm48, %v94
    // Predicated region
    $region18: #{multi_head_attention.5} parent=1 // pred_check
      %p97 = pneg %p16
    $region19: #{multi_head_attention.5} parent=1 // pred_check_branch
      %99 = sbr.rel (%p97) target = $region21
    $region20: #{multi_head_attention.5} parent=1 // pred_region
      %v100 = vld [vmem:[#allocation2] sm:$0xff]
      %v101 = vld [vmem:[#allocation2 + $0x8] sm:$0xff]
      %v102 = vld [vmem:[%s2] sm:$0x1]
      %v104 = vlaneseq
      %v105 = vshrl.u32 %v104, 7
      %v106 = vsub.s32 0, %v105
      %v107 = vrot.slane %v102, %v106
      %v109 = vadd.f32 %v100, %v107
      %v110 = vadd.f32 %v101, %v107
      %111 = vst.msk [vmem:[#allocation3] sm:$0xff] %vm48, %v109
      %112 = vst.msk [vmem:[#allocation3 + $0x8] sm:$0xff] %vm48, %v110
    $region21: #{multi_head_attention.5} parent=1 // pred_fallthru
      _
    // Predicated region
    $region22: #{multi_head_attention.5} parent=1 // pred_check
      _
    $region23: #{multi_head_attention.5} parent=1 // pred_check_branch
      %114 = sbr.rel (0) target = $region25
    $region24: #{multi_head_attention.5} parent=1 // pred_region
      %s116 = ssub.s32 256, 256
      %117 = vsyncadd [#allocation4], %s116
      %s118 = sshll.u32 [#allocation3], 4
      %s119 = int_to_ptr.vmem [resolvable:$true] %s118
      %124 = dma.vmem_to_hbm [thread:$0]  %s119, 256, %s3, [#allocation4], 128, 128, 8
    $region25: #{multi_head_attention.5} parent=1 // pred_fallthru
      _
    // Predicated region
    $region26: #{multi_head_attention.5} parent=1 // pred_check
      _
    $region27: #{multi_head_attention.5} parent=1 // pred_check_branch
      %126 = sbr.rel (0) target = $region29
    $region28: #{multi_head_attention.5} parent=1 // pred_region
      %127 = dma.done [#allocation4], 256
    $region29: #{multi_head_attention.5} parent=1 // pred_fallthru
      _
    %128 = vsyncpa [#allocation4], 1

// kernel: multi_head_attention.4
$region0: #{multi_head_attention.4}
  #allocation0 [shape = 'u32[]', space=smem, size = 0x4, offset = 0x4, fixed_abs, tag = 'smem constant byte address 0x4 - core index']
  #allocation1 [shape = 'u32[144,128]{1,0:T(1,128)}', space=vmem, size = 0x12000, scoped, tag = 'internal scratch']
  #allocation2 [shape = 'f32[4,8,1]{2,1,0:T(8,128)}', space=vmem, size = 0x4000, scoped, tag = 'scratch operand']
  #allocation3 [shape = 'f32[4,8,1]{2,1,0:T(8,128)}', space=vmem, size = 0x4000, scoped, tag = 'scratch operand']
  #allocation4 [shape = 'f32[4,8,8]{2,1,0:T(8,128)}', space=vmem, size = 0x4000, scoped, tag = 'scratch operand']
  %s0 = inlined_call_operand.vmem [shape: bf16[3,2,4,8,8], index: 0, kind: input, shape index: {}, may-alias: {0,1,2}]
  %s1 = inlined_call_operand.vmem [shape: bf16[3,2,4,8,8], index: 1, kind: input, shape index: {}, may-alias: {0,1,2}]
  %s2 = inlined_call_operand.vmem [shape: bf16[3,2,4,8,8], index: 2, kind: input, shape index: {}, may-alias: {0,1,2}]
  %s3 = inlined_call_operand.vmem [shape: bf16[2,8,32], index: 3, kind: output, shape index: {}]
  %s4 = sld [smem:[#allocation0]]
  $region53: #{multi_head_attention.4} parent=0
    _
  %s6 = ssub.s32 1, %s4
  %s7 = scalar_select 0, %s6, %s4
  loop: start=0, step=1, limit=4
  $region2: #{multi_head_attention.4} parent=0 // loop_pre_header
    _
  $region3: #{multi_head_attention.4} parent=0 // loop_header
    %s9 = sphi 0, %s13
    %p10 = scmp.ge.s32.totalorder %s9, 4
    %s16 = sphi 0, %s35
    %s17 = sphi 0, %s31
    %s18 = sphi 0, %s27
    %s19 = sphi 0, %s16
    %s20 = sphi 0, %s17
    %s21 = sphi 0, %s18
    %s22 = sphi 0, %s19
    %s23 = sphi 0, %s20
    %s24 = sphi 0, %s21
    %s40 = sphi 0, %s42
    %s43 = sphi 0, %s40
    %s44 = sphi 0, %s43
    %s60 = sphi 0, %s44
    %s68 = sphi 0, %s70
    %s71 = sphi 0, %s68
    %s72 = sphi 0, %s71
    %s88 = sphi 0, %s72
    %s96 = sphi 0, %s98
    %s99 = sphi 0, %s96
    %s100 = sphi 0, %s99
    %s116 = sphi 0, %s100
    %s124 = sphi 0, %s126
    %s127 = sphi 0, %s124
    %s128 = sphi 0, %s127
    %s144 = sphi 0, %s128
  $region4: #{multi_head_attention.4} parent=0 // loop_header_branch
    %12 = sbr.rel (%p10) target = $region8
  $region5: #{multi_head_attention.4} parent=0 // loop_body
    %s14 = ssub.s32 %s9, 1
    %s15 = ssub.s32 %s9, 2
    %s25 = sadd.s32 1, %s18
    %p26 = scmp.ge.s32.totalorder %s25, 1
    %s27 = scalar_select %p26, 0, %s25
    %s28 = sadd.s32 1, %s17
    %s29 = scalar_select %p26, %s28, %s17
    %p30 = scmp.ge.s32.totalorder %s29, 1
    %s31 = scalar_select %p30, 0, %s29
    %s32 = sadd.s32 1, %s16
    %s33 = scalar_select %p30, %s32, %s16
    %p34 = scmp.ge.s32.totalorder %s33, 2
    %s35 = scalar_select %p34, 0, %s33
    %s36 = ssub.s32 %s16, %s35
    %s37 = ssub.s32 %s17, %s31
    %s38 = sor.u32 %s36, %s37
    %p39 = scmp.eq.s32.totalorder %s38, 0
    %s41 = sadd.s32 %s40, 1
    %s42 = scalar_select %p39, %s40, %s41
    %p45 = pneg %p39
    %p46 = scmp.eq.s32.totalorder %s9, 1
    %p47 = por %p45, %p46
    %p48 = scmp.ne.s32.totalorder %s40, %s43
    %p49 = scmp.eq.s32.totalorder %s9, 0
    %p50 = por %p48, %p49
    %p51 = scmp.ne.s32.totalorder %s40, %s43
    %p52 = scmp.eq.s32.totalorder %s14, 1
    %p53 = por %p51, %p52
    %p54 = scmp.ne.s32.totalorder %s43, %s44
    %p55 = scmp.eq.s32.totalorder %s14, 0
    %p56 = por %p54, %p55
    %p57 = scmp.ne.s32.totalorder %s43, %s44
    %p58 = scmp.eq.s32.totalorder %s15, 1
    %p59 = por %p57, %p58
    %p61 = scmp.ne.s32.totalorder %s44, %s60
    %p62 = scmp.eq.s32.totalorder %s15, 0
    %p63 = por %p61, %p62
    %s64 = ssub.s32 %s16, %s35
    %s65 = ssub.s32 %s18, %s27
    %s66 = sor.u32 %s64, %s65
    %p67 = scmp.eq.s32.totalorder %s66, 0
    %s69 = sadd.s32 %s68, 1
    %s70 = scalar_select %p67, %s68, %s69
    %p73 = pneg %p67
    %p74 = scmp.eq.s32.totalorder %s9, 1
    %p75 = por %p73, %p74
    %p76 = scmp.ne.s32.totalorder %s68, %s71
    %p77 = scmp.eq.s32.totalorder %s9, 0
    %p78 = por %p76, %p77
    %p79 = scmp.ne.s32.totalorder %s68, %s71
    %p80 = scmp.eq.s32.totalorder %s14, 1
    %p81 = por %p79, %p80
    %p82 = scmp.ne.s32.totalorder %s71, %s72
    %p83 = scmp.eq.s32.totalorder %s14, 0
    %p84 = por %p82, %p83
    %p85 = scmp.ne.s32.totalorder %s71, %s72
    %p86 = scmp.eq.s32.totalorder %s15, 1
    %p87 = por %p85, %p86
    %p89 = scmp.ne.s32.totalorder %s72, %s88
    %p90 = scmp.eq.s32.totalorder %s15, 0
    %p91 = por %p89, %p90
    %s92 = ssub.s32 %s16, %s35
    %s93 = ssub.s32 %s18, %s27
    %s94 = sor.u32 %s92, %s93
    %p95 = scmp.eq.s32.totalorder %s94, 0
    %s97 = sadd.s32 %s96, 1
    %s98 = scalar_select %p95, %s96, %s97
    %p101 = pneg %p95
    %p102 = scmp.eq.s32.totalorder %s9, 1
    %p103 = por %p101, %p102
    %p104 = scmp.ne.s32.totalorder %s96, %s99
    %p105 = scmp.eq.s32.totalorder %s9, 0
    %p106 = por %p104, %p105
    %p107 = scmp.ne.s32.totalorder %s96, %s99
    %p108 = scmp.eq.s32.totalorder %s14, 1
    %p109 = por %p107, %p108
    %p110 = scmp.ne.s32.totalorder %s99, %s100
    %p111 = scmp.eq.s32.totalorder %s14, 0
    %p112 = por %p110, %p111
    %p113 = scmp.ne.s32.totalorder %s99, %s100
    %p114 = scmp.eq.s32.totalorder %s15, 1
    %p115 = por %p113, %p114
    %p117 = scmp.ne.s32.totalorder %s100, %s116
    %p118 = scmp.eq.s32.totalorder %s15, 0
    %p119 = por %p117, %p118
    %s120 = ssub.s32 %s16, %s35
    %s121 = ssub.s32 %s17, %s31
    %s122 = sor.u32 %s120, %s121
    %p123 = scmp.eq.s32.totalorder %s122, 0
    %s125 = sadd.s32 %s124, 1
    %s126 = scalar_select %p123, %s124, %s125
    %p129 = pneg %p123
    %p130 = scmp.eq.s32.totalorder %s9, 1
    %p131 = por %p129, %p130
    %p132 = scmp.ne.s32.totalorder %s124, %s127
    %p133 = scmp.eq.s32.totalorder %s9, 0
    %p134 = por %p132, %p133
    %p135 = scmp.ne.s32.totalorder %s124, %s127
    %p136 = scmp.eq.s32.totalorder %s14, 1
    %p137 = por %p135, %p136
    %p138 = scmp.ne.s32.totalorder %s127, %s128
    %p139 = scmp.eq.s32.totalorder %s14, 0
    %p140 = por %p138, %p139
    %p141 = scmp.ne.s32.totalorder %s127, %s128
    %p142 = scmp.eq.s32.totalorder %s15, 1
    %p143 = por %p141, %p142
    %p145 = scmp.ne.s32.totalorder %s128, %s144
    %p146 = scmp.eq.s32.totalorder %s15, 0
    %p147 = por %p145, %p146
    %p148 = scmp.le.s32.totalorder 1, %s9
    %p149 = scmp.lt.s32.totalorder %s9, 3
    %p150 = pnand %p148, %p149
    %p151 = pneg %p150
    // Predicated region
    $region9: #{multi_head_attention.4} parent=5 // pred_check
      _
    $region10: #{multi_head_attention.4} parent=5 // pred_check_branch
      %153 = sbr.rel (%p150) target = $region12
    $region11: #{multi_head_attention.4} parent=5 // pred_region
      %s154 = ssub.s32 %s9, 1
    $region12: #{multi_head_attention.4} parent=5 // pred_fallthru
      _
    %p155 = scmp.lt.s32.totalorder %s9, 2
    // Predicated region
    $region13: #{multi_head_attention.4} parent=5 // pred_check
      %p156 = pneg %p155
    $region14: #{multi_head_attention.4} parent=5 // pred_check_branch
      %158 = sbr.rel (%p156) target = $region16
    $region15: #{multi_head_attention.4} parent=5 // pred_region
      // Predicated region
      $region17: #{multi_head_attention.4} parent=15 // pred_check
        %p159 = pneg %p50
      $region18: #{multi_head_attention.4} parent=15 // pred_check_branch
        %161 = sbr.rel (%p159) target = $region20
      $region19: #{multi_head_attention.4} parent=15 // pred_region
        %p162 = scmp.lt.s32.totalorder %s16, 1
        %s163 = scalar_select %p162, %s16, 1
        %p164 = scmp.lt.s32.totalorder %s17, 0
        %s165 = scalar_select %p164, %s17, 0
        %s166 = smul.addr %s163, 4
        %s167 = sadd.s32 %s165, %s166
        %s168 = smul.addr %s167, 4
        %s169 = scalar_lea.vmem %s0, %s168
      $region20: #{multi_head_attention.4} parent=15 // pred_fallthru
        _
      // Predicated region
      $region21: #{multi_head_attention.4} parent=15 // pred_check
        %p170 = pneg %p78
      $region22: #{multi_head_attention.4} parent=15 // pred_check_branch
        %172 = sbr.rel (%p170) target = $region24
      $region23: #{multi_head_attention.4} parent=15 // pred_region
        %p173 = scmp.lt.s32.totalorder %s16, 1
        %s174 = scalar_select %p173, %s16, 1
        %p175 = scmp.lt.s32.totalorder %s18, 0
        %s176 = scalar_select %p175, %s18, 0
        %s177 = smul.addr %s174, 4
        %s178 = sadd.s32 %s176, %s177
        %s179 = sadd.s32 %s178, 8
        %s180 = smul.addr %s179, 4
        %s181 = scalar_lea.vmem %s1, %s180
      $region24: #{multi_head_attention.4} parent=15 // pred_fallthru
        _
      // Predicated region
      $region25: #{multi_head_attention.4} parent=15 // pred_check
        %p182 = pneg %p106
      $region26: #{multi_head_attention.4} parent=15 // pred_check_branch
        %184 = sbr.rel (%p182) target = $region28
      $region27: #{multi_head_attention.4} parent=15 // pred_region
        %p185 = scmp.lt.s32.totalorder %s16, 1
        %s186 = scalar_select %p185, %s16, 1
        %p187 = scmp.lt.s32.totalorder %s18, 0
        %s188 = scalar_select %p187, %s18, 0
        %s189 = smul.addr %s186, 4
        %s190 = sadd.s32 %s188, %s189
        %s191 = sadd.s32 %s190, 16
        %s192 = smul.addr %s191, 4
        %s193 = scalar_lea.vmem %s2, %s192
      $region28: #{multi_head_attention.4} parent=15 // pred_fallthru
        _
    $region16: #{multi_head_attention.4} parent=5 // pred_fallthru
      _
    %p194 = scmp.le.s32.totalorder 1, %s9
    %p195 = scmp.lt.s32.totalorder %s9, 3
    %p196 = pnand %p194, %p195
    %p197 = pneg %p196
    // Predicated region
    $region29: #{multi_head_attention.4} parent=5 // pred_check
      _
    $region30: #{multi_head_attention.4} parent=5 // pred_check_branch
      %199 = sbr.rel (%p196) target = $region32
    $region31: #{multi_head_attention.4} parent=5 // pred_region
      %s200 = ssub.s32 %s9, 1
      %p201 = scmp.lt.s32.totalorder %s19, 1
      %s202 = scalar_select %p201, %s19, 1
      %p203 = scmp.lt.s32.totalorder %s20, 0
      %s204 = scalar_select %p203, %s20, 0
      %s205 = smul.addr %s202, 4
      %s206 = sadd.s32 %s204, %s205
      %s207 = smul.addr %s206, 4
      %s208 = scalar_lea.vmem %s0, %s207
      %p209 = pneg %p56
      %p210 = pneg %p53
      %p211 = scmp.lt.s32.totalorder %s19, 1
      %s212 = scalar_select %p211, %s19, 1
      %p213 = scmp.lt.s32.totalorder %s21, 0
      %s214 = scalar_select %p213, %s21, 0
      %s215 = smul.addr %s212, 4
      %s216 = sadd.s32 %s214, %s215
      %s217 = sadd.s32 %s216, 8
      %s218 = smul.addr %s217, 4
      %s219 = scalar_lea.vmem %s1, %s218
      %p220 = pneg %p84
      %p221 = pneg %p81
      %p222 = scmp.lt.s32.totalorder %s19, 1
      %s223 = scalar_select %p222, %s19, 1
      %p224 = scmp.lt.s32.totalorder %s21, 0
      %s225 = scalar_select %p224, %s21, 0
      %s226 = smul.addr %s223, 4
      %s227 = sadd.s32 %s225, %s226
      %s228 = sadd.s32 %s227, 16
      %s229 = smul.addr %s228, 4
      %s230 = scalar_lea.vmem %s2, %s229
      %p231 = pneg %p112
      %p232 = pneg %p109
      %p233 = pneg %p140
      %p234 = pneg %p137
      %p235 = scmp.lt.s32.totalorder %s19, 1
      %s236 = scalar_select %p235, %s19, 1
      %p237 = scmp.lt.s32.totalorder %s20, 0
      %s238 = scalar_select %p237, %s20, 0
      %s239 = sadd.s32 %s238, %s236
      %s240 = smul.addr %s239, 4
      %s241 = scalar_lea.vmem %s3, %s240
      %p242 = scmp.lt.s32.totalorder %s19, 1
      %s243 = scalar_select %p242, %s19, 1
      %p244 = scmp.lt.s32.totalorder %s20, 0
      %s245 = scalar_select %p244, %s20, 0
      %s246 = smul.addr %s243, 4
      %s247 = sadd.s32 %s245, %s246
      %s248 = smul.addr %s247, 4
      %s249 = scalar_lea.vmem %s0, %s248
      %p250 = scmp.lt.s32.totalorder %s19, 1
      %s251 = scalar_select %p250, %s19, 1
      %p252 = scmp.lt.s32.totalorder %s21, 0
      %s253 = scalar_select %p252, %s21, 0
      %s254 = smul.addr %s251, 4
      %s255 = sadd.s32 %s253, %s254
      %s256 = sadd.s32 %s255, 8
      %s257 = smul.addr %s256, 4
      %s258 = scalar_lea.vmem %s1, %s257
      %p259 = scmp.lt.s32.totalorder %s19, 1
      %s260 = scalar_select %p259, %s19, 1
      %p261 = scmp.lt.s32.totalorder %s21, 0
      %s262 = scalar_select %p261, %s21, 0
      %s263 = smul.addr %s260, 4
      %s264 = sadd.s32 %s262, %s263
      %s265 = sadd.s32 %s264, 16
      %s266 = smul.addr %s265, 4
      %s267 = scalar_lea.vmem %s2, %s266
      %p268 = scmp.lt.s32.totalorder %s19, 1
      %s269 = scalar_select %p268, %s19, 1
      %p270 = scmp.lt.s32.totalorder %s20, 0
      %s271 = scalar_select %p270, %s20, 0
      %s272 = sadd.s32 %s271, %s269
      %s273 = smul.addr %s272, 4
      %s274 = scalar_lea.vmem %s3, %s273
      %p276 = scmp.eq.s32.totalorder %s21, 0
      // Predicated region
      $region33: #{multi_head_attention.4} parent=31 // pred_check
        %p277 = pneg %p276
      $region34: #{multi_head_attention.4} parent=31 // pred_check_branch
        %279 = sbr.rel (%p277) target = $region36
      $region35: #{multi_head_attention.4} parent=31 // pred_region
        %vm280 = vcmask 7168
        %281 = vst.msk [vmem:[#allocation2] sm:$0xff] %vm280, -inf
        %282 = vst.msk [vmem:[#allocation2 + $0x8] sm:$0xff] %vm280, -inf
        %283 = vst.msk [vmem:[#allocation2 + $0x10] sm:$0xff] %vm280, -inf
        %284 = vst.msk [vmem:[#allocation2 + $0x18] sm:$0xff] %vm280, -inf
        %285 = vst.msk [vmem:[#allocation3] sm:$0xff] %vm280, 0.0
        %286 = vst.msk [vmem:[#allocation3 + $0x8] sm:$0xff] %vm280, 0.0
        %287 = vst.msk [vmem:[#allocation3 + $0x10] sm:$0xff] %vm280, 0.0
        %288 = vst.msk [vmem:[#allocation3 + $0x18] sm:$0xff] %vm280, 0.0
        %vm289 = vcmask 64512
        %290 = vst.msk [vmem:[#allocation4] sm:$0xff] %vm289, 0.0
        %291 = vst.msk [vmem:[#allocation4 + $0x8] sm:$0xff] %vm289, 0.0
        %292 = vst.msk [vmem:[#allocation4 + $0x10] sm:$0xff] %vm289, 0.0
        %293 = vst.msk [vmem:[#allocation4 + $0x18] sm:$0xff] %vm289, 0.0
      $region36: #{multi_head_attention.4} parent=31 // pred_fallthru
        _
      %v294 = vld [vmem:[%s249] sm:$0xf]
      %v295 = vld [vmem:[%s249 + $0x4] sm:$0xf]
      %v296 = vld [vmem:[%s249 + $0x8] sm:$0xf]
      %v297 = vld [vmem:[%s249 + $0xc] sm:$0xf]
      %v298 = vld [vmem:[%s258] sm:$0xf]
      %v299 = vld [vmem:[%s258 + $0x4] sm:$0xf]
      %v300 = vld [vmem:[%s258 + $0x8] sm:$0xf]
      %v301 = vld [vmem:[%s258 + $0xc] sm:$0xf]
      %v302 = vld [vmem:[%s267] sm:$0xf]
      %v303 = vld [vmem:[%s267 + $0x4] sm:$0xf]
      %v304 = vld [vmem:[%s267 + $0x8] sm:$0xf]
      %v305 = vld [vmem:[%s267 + $0xc] sm:$0xf]
      %vm306 = vcmask 64512
      %v308 = vsel %vm306, %v294, 0
      %v311 = vsel %vm306, %v298, 0
      %313 = vmatprep.subr.bf16.mxu0 0
      %314 = vmatpush1.bf16.xpose.msra.mxu0 0
      %315 = vmatprep.subr.bf16.mxu0 0
      %316 = vmatpush1.bf16.xpose.msra.mxu0 0
      %317 = vmatprep.subr.bf16.mxu0 0
      %318 = vmatpush1.bf16.xpose.msra.mxu0 0
      %319 = vmatprep.subr.bf16.mxu0 0
      %320 = vmatpush1.bf16.xpose.msra.mxu0 0
      %321 = vmatprep.subr.bf16.mxu0 0
      %322 = vmatpush1.bf16.xpose.msra.mxu0 0
      %323 = vmatprep.subr.bf16.mxu0 0
      %324 = vmatpush1.bf16.xpose.msra.mxu0 0
      %325 = vmatprep.subr.bf16.mxu0 0
      %326 = vmatpush1.bf16.xpose.msra.mxu0 0
      %327 = vmatprep.subr.bf16.mxu0 0
      %328 = vmatpush1.bf16.xpose.msra.mxu0 %v311
      %329 = vmatprep.subr.bf16.mxu0 0
      %330 = vmatpush2.bf16.xpose.msra.mxu0 0
      %331 = vmatprep.subr.bf16.mxu0 0
      %332 = vmatpush2.bf16.xpose.msra.mxu0 0
      %333 = vmatprep.subr.bf16.mxu0 0
      %334 = vmatpush2.bf16.xpose.msra.mxu0 0
      %335 = vmatprep.subr.bf16.mxu0 0
      %336 = vmatpush2.bf16.xpose.msra.mxu0 0
      %337 = vmatprep.subr.bf16.mxu0 0
      %338 = vmatpush2.bf16.xpose.msra.mxu0 0
      %339 = vmatprep.subr.bf16.mxu0 0
      %340 = vmatpush2.bf16.xpose.msra.mxu0 0
      %341 = vmatprep.subr.bf16.mxu0 0
      %342 = vmatpush2.bf16.xpose.msra.mxu0 0
      %343 = vmatprep.subr.bf16.mxu0 0
      %344 = vmatpush2.bf16.xpose.msra.mxu0 0
      %345 = vmatprep.mubr.bf16.mxu0 0
      %346 = vmatmul.mubr.bf16.gmra.mxu0 %v308
      %v347 = vpop.f32.mrf.mxu0
      %v348 = vadd.f32 0.0, %v347
      %v349 = vpop.f32.mrf.mxu0
      %v350 = vpop.f32.mrf.mxu0
      %v351 = vpop.f32.mrf.mxu0
      %352 = vdwg.mxu0
      %v354 = vsel %vm306, %v295, 0
      %v357 = vsel %vm306, %v299, 0
      %359 = vmatprep.subr.bf16.mxu0 0
      %360 = vmatpush1.bf16.xpose.msra.mxu0 0
      %361 = vmatprep.subr.bf16.mxu0 0
      %362 = vmatpush1.bf16.xpose.msra.mxu0 0
      %363 = vmatprep.subr.bf16.mxu0 0
      %364 = vmatpush1.bf16.xpose.msra.mxu0 0
      %365 = vmatprep.subr.bf16.mxu0 0
      %366 = vmatpush1.bf16.xpose.msra.mxu0 0
      %367 = vmatprep.subr.bf16.mxu0 0
      %368 = vmatpush1.bf16.xpose.msra.mxu0 0
      %369 = vmatprep.subr.bf16.mxu0 0
      %370 = vmatpush1.bf16.xpose.msra.mxu0 0
      %371 = vmatprep.subr.bf16.mxu0 0
      %372 = vmatpush1.bf16.xpose.msra.mxu0 0
      %373 = vmatprep.subr.bf16.mxu0 0
      %374 = vmatpush1.bf16.xpose.msra.mxu0 %v357
      %375 = vmatprep.subr.bf16.mxu0 0
      %376 = vmatpush2.bf16.xpose.msra.mxu0 0
      %377 = vmatprep.subr.bf16.mxu0 0
      %378 = vmatpush2.bf16.xpose.msra.mxu0 0
      %379 = vmatprep.subr.bf16.mxu0 0
      %380 = vmatpush2.bf16.xpose.msra.mxu0 0
      %381 = vmatprep.subr.bf16.mxu0 0
      %382 = vmatpush2.bf16.xpose.msra.mxu0 0
      %383 = vmatprep.subr.bf16.mxu0 0
      %384 = vmatpush2.bf16.xpose.msra.mxu0 0
      %385 = vmatprep.subr.bf16.mxu0 0
      %386 = vmatpush2.bf16.xpose.msra.mxu0 0
      %387 = vmatprep.subr.bf16.mxu0 0
      %388 = vmatpush2.bf16.xpose.msra.mxu0 0
      %389 = vmatprep.subr.bf16.mxu0 0
      %390 = vmatpush2.bf16.xpose.msra.mxu0 0
      %391 = vmatprep.mubr.bf16.mxu0 0
      %392 = vmatmul.mubr.bf16.gmra.mxu0 %v354
      %v393 = vpop.f32.mrf.mxu0
      %v394 = vadd.f32 0.0, %v393
      %v395 = vpop.f32.mrf.mxu0
      %v396 = vpop.f32.mrf.mxu0
      %v397 = vpop.f32.mrf.mxu0
      %398 = vdwg.mxu0
      %v400 = vsel %vm306, %v296, 0
      %v403 = vsel %vm306, %v300, 0
      %405 = vmatprep.subr.bf16.mxu0 0
      %406 = vmatpush1.bf16.xpose.msra.mxu0 0
      %407 = vmatprep.subr.bf16.mxu0 0
      %408 = vmatpush1.bf16.xpose.msra.mxu0 0
      %409 = vmatprep.subr.bf16.mxu0 0
      %410 = vmatpush1.bf16.xpose.msra.mxu0 0
      %411 = vmatprep.subr.bf16.mxu0 0
      %412 = vmatpush1.bf16.xpose.msra.mxu0 0
      %413 = vmatprep.subr.bf16.mxu0 0
      %414 = vmatpush1.bf16.xpose.msra.mxu0 0
      %415 = vmatprep.subr.bf16.mxu0 0
      %416 = vmatpush1.bf16.xpose.msra.mxu0 0
      %417 = vmatprep.subr.bf16.mxu0 0
      %418 = vmatpush1.bf16.xpose.msra.mxu0 0
      %419 = vmatprep.subr.bf16.mxu0 0
      %420 = vmatpush1.bf16.xpose.msra.mxu0 %v403
      %421 = vmatprep.subr.bf16.mxu0 0
      %422 = vmatpush2.bf16.xpose.msra.mxu0 0
      %423 = vmatprep.subr.bf16.mxu0 0
      %424 = vmatpush2.bf16.xpose.msra.mxu0 0
      %425 = vmatprep.subr.bf16.mxu0 0
      %426 = vmatpush2.bf16.xpose.msra.mxu0 0
      %427 = vmatprep.subr.bf16.mxu0 0
      %428 = vmatpush2.bf16.xpose.msra.mxu0 0
      %429 = vmatprep.subr.bf16.mxu0 0
      %430 = vmatpush2.bf16.xpose.msra.mxu0 0
      %431 = vmatprep.subr.bf16.mxu0 0
      %432 = vmatpush2.bf16.xpose.msra.mxu0 0
      %433 = vmatprep.subr.bf16.mxu0 0
      %434 = vmatpush2.bf16.xpose.msra.mxu0 0
      %435 = vmatprep.subr.bf16.mxu0 0
      %436 = vmatpush2.bf16.xpose.msra.mxu0 0
      %437 = vmatprep.mubr.bf16.mxu0 0
      %438 = vmatmul.mubr.bf16.gmra.mxu0 %v400
      %v439 = vpop.f32.mrf.mxu0
      %v440 = vadd.f32 0.0, %v439
      %v441 = vpop.f32.mrf.mxu0
      %v442 = vpop.f32.mrf.mxu0
      %v443 = vpop.f32.mrf.mxu0
      %444 = vdwg.mxu0
      %v446 = vsel %vm306, %v297, 0
      %v449 = vsel %vm306, %v301, 0
      %451 = vmatprep.subr.bf16.mxu0 0
      %452 = vmatpush1.bf16.xpose.msra.mxu0 0
      %453 = vmatprep.subr.bf16.mxu0 0
      %454 = vmatpush1.bf16.xpose.msra.mxu0 0
      %455 = vmatprep.subr.bf16.mxu0 0
      %456 = vmatpush1.bf16.xpose.msra.mxu0 0
      %457 = vmatprep.subr.bf16.mxu0 0
      %458 = vmatpush1.bf16.xpose.msra.mxu0 0
      %459 = vmatprep.subr.bf16.mxu0 0
      %460 = vmatpush1.bf16.xpose.msra.mxu0 0
      %461 = vmatprep.subr.bf16.mxu0 0
      %462 = vmatpush1.bf16.xpose.msra.mxu0 0
      %463 = vmatprep.subr.bf16.mxu0 0
      %464 = vmatpush1.bf16.xpose.msra.mxu0 0
      %465 = vmatprep.subr.bf16.mxu0 0
      %466 = vmatpush1.bf16.xpose.msra.mxu0 %v449
      %467 = vmatprep.subr.bf16.mxu0 0
      %468 = vmatpush2.bf16.xpose.msra.mxu0 0
      %469 = vmatprep.subr.bf16.mxu0 0
      %470 = vmatpush2.bf16.xpose.msra.mxu0 0
      %471 = vmatprep.subr.bf16.mxu0 0
      %472 = vmatpush2.bf16.xpose.msra.mxu0 0
      %473 = vmatprep.subr.bf16.mxu0 0
      %474 = vmatpush2.bf16.xpose.msra.mxu0 0
      %475 = vmatprep.subr.bf16.mxu0 0
      %476 = vmatpush2.bf16.xpose.msra.mxu0 0
      %477 = vmatprep.subr.bf16.mxu0 0
      %478 = vmatpush2.bf16.xpose.msra.mxu0 0
      %479 = vmatprep.subr.bf16.mxu0 0
      %480 = vmatpush2.bf16.xpose.msra.mxu0 0
      %481 = vmatprep.subr.bf16.mxu0 0
      %482 = vmatpush2.bf16.xpose.msra.mxu0 0
      %483 = vmatprep.mubr.bf16.mxu0 0
      %484 = vmatmul.mubr.bf16.gmra.mxu0 %v446
      %v485 = vpop.f32.mrf.mxu0
      %v486 = vadd.f32 0.0, %v485
      %v487 = vpop.f32.mrf.mxu0
      %v488 = vpop.f32.mrf.mxu0
      %v489 = vpop.f32.mrf.mxu0
      %490 = vdwg.mxu0
      %v491 = vld [vmem:[#allocation2] sm:$0xff]
      %v492 = vld [vmem:[#allocation2 + $0x8] sm:$0xff]
      %v493 = vld [vmem:[#allocation2 + $0x10] sm:$0xff]
      %v494 = vld [vmem:[#allocation2 + $0x18] sm:$0xff]
      %v495 = vsel %vm306, %v348, -inf
      %496 = vmax.xlane.f32.xlu0 %v495
      %v497 = vpop.xlane.xlu0 %496
      %v498 = vsel %vm306, %v394, -inf
      %499 = vmax.xlane.f32.xlu0 %v498
      %v500 = vpop.xlane.xlu0 %499
      %v501 = vsel %vm306, %v440, -inf
      %502 = vmax.xlane.f32.xlu0 %v501
      %v503 = vpop.xlane.xlu0 %502
      %v504 = vsel %vm306, %v486, -inf
      %505 = vmax.xlane.f32.xlu0 %v504
      %v506 = vpop.xlane.xlu0 %505
      %v507 = vmax.f32 %v491, %v497
      %v508 = vmax.f32 %v492, %v500
      %v509 = vmax.f32 %v493, %v503
      %v510 = vmax.f32 %v494, %v506
      %v511 = vsub.f32 %v491, %v507
      %v512 = vsub.f32 %v492, %v508
      %v513 = vsub.f32 %v493, %v509
      %v514 = vsub.f32 %v494, %v510
      %v515 = vmul.f32 %v511, 1.442695
      %v516 = vpow.pop %v515
      %v517 = vmul.f32 %v512, 1.442695
      %v518 = vpow.pop %v517
      %v519 = vmul.f32 %v513, 1.442695
      %v520 = vpow.pop %v519
      %v521 = vmul.f32 %v514, 1.442695
      %v522 = vpow.pop %v521
      %524 = vset.pattern.permute.xlu0 0
      %525 = vperm.xlu0 %524, %v507
      %v526 = vpop.permute.xlu0 %525
      %529 = vset.pattern.permute.xlu0 0
      %530 = vperm.xlu0 %529, %v508
      %v531 = vpop.permute.xlu0 %530
      %534 = vset.pattern.permute.xlu0 0
      %535 = vperm.xlu0 %534, %v509
      %v536 = vpop.permute.xlu0 %535
      %539 = vset.pattern.permute.xlu0 0
      %540 = vperm.xlu0 %539, %v510
      %v541 = vpop.permute.xlu0 %540
      %v543 = vsub.f32 %v348, %v526
      %v544 = vsub.f32 %v394, %v531
      %v545 = vsub.f32 %v440, %v536
      %v546 = vsub.f32 %v486, %v541
      %v547 = vmul.f32 %v543, 1.442695
      %v548 = vpow.pop %v547
      %v549 = vmul.f32 %v544, 1.442695
      %v550 = vpow.pop %v549
      %v551 = vmul.f32 %v545, 1.442695
      %v552 = vpow.pop %v551
      %v553 = vmul.f32 %v546, 1.442695
      %v554 = vpow.pop %v553
      %v555 = vld [vmem:[#allocation3] sm:$0xff]
      %v556 = vld [vmem:[#allocation3 + $0x8] sm:$0xff]
      %v557 = vld [vmem:[#allocation3 + $0x10] sm:$0xff]
      %v558 = vld [vmem:[#allocation3 + $0x18] sm:$0xff]
      %v559 = vmul.f32 %v516, %v555
      %v560 = vmul.f32 %v518, %v556
      %v561 = vmul.f32 %v520, %v557
      %v562 = vmul.f32 %v522, %v558
      %v563 = vsel %vm306, %v548, 0.0
      %564 = vadd.xlane.f32.xlu0 %v563
      %v565 = vpop.xlane.xlu0 %564
      %v566 = vsel %vm306, %v550, 0.0
      %567 = vadd.xlane.f32.xlu0 %v566
      %v568 = vpop.xlane.xlu0 %567
      %v569 = vsel %vm306, %v552, 0.0
      %570 = vadd.xlane.f32.xlu0 %v569
      %v571 = vpop.xlane.xlu0 %570
      %v572 = vsel %vm306, %v554, 0.0
      %573 = vadd.xlane.f32.xlu0 %v572
      %v574 = vpop.xlane.xlu0 %573
      %v575 = vadd.f32 %v559, %v565
      %v576 = vadd.f32 %v560, %v568
      %v577 = vadd.f32 %v561, %v571
      %v578 = vadd.f32 %v562, %v574
      %vm579 = vcmask 7168
      %580 = vst.msk [vmem:[#allocation3] sm:$0xff] %vm579, %v575
      %581 = vst.msk [vmem:[#allocation3 + $0x8] sm:$0xff] %vm579, %v576
      %582 = vst.msk [vmem:[#allocation3 + $0x10] sm:$0xff] %vm579, %v577
      %583 = vst.msk [vmem:[#allocation3 + $0x18] sm:$0xff] %vm579, %v578
      %v584 = vpack.c.bf16 %v548, %v548
      %v585 = vpack.c.bf16 %v550, %v550
      %v586 = vpack.c.bf16 %v552, %v552
      %v587 = vpack.c.bf16 %v554, %v554
      %v589 = vsel %vm306, %v584, 0
      %vm591 = vcmask 1043456
      %v593 = vsel %vm591, %v302, 0
      %595 = vmatprep.subr.bf16.mxu0 0
      %596 = vmatpush1.bf16.msra.mxu0 0
      %597 = vmatprep.subr.bf16.mxu0 0
      %598 = vmatpush1.bf16.msra.mxu0 0
      %599 = vmatprep.subr.bf16.mxu0 0
      %600 = vmatpush1.bf16.msra.mxu0 0
      %601 = vmatprep.subr.bf16.mxu0 0
      %602 = vmatpush1.bf16.msra.mxu0 0
      %603 = vmatprep.subr.bf16.mxu0 0
      %604 = vmatpush1.bf16.msra.mxu0 0
      %605 = vmatprep.subr.bf16.mxu0 0
      %606 = vmatpush1.bf16.msra.mxu0 0
      %607 = vmatprep.subr.bf16.mxu0 0
      %608 = vmatpush1.bf16.msra.mxu0 0
      %609 = vmatprep.subr.bf16.mxu0 0
      %610 = vmatpush1.bf16.msra.mxu0 %v593
      %611 = vmatprep.subr.bf16.mxu0 0
      %612 = vmatpush2.bf16.msra.mxu0 0
      %613 = vmatprep.subr.bf16.mxu0 0
      %614 = vmatpush2.bf16.msra.mxu0 0
      %615 = vmatprep.subr.bf16.mxu0 0
      %616 = vmatpush2.bf16.msra.mxu0 0
      %617 = vmatprep.subr.bf16.mxu0 0
      %618 = vmatpush2.bf16.msra.mxu0 0
      %619 = vmatprep.subr.bf16.mxu0 0
      %620 = vmatpush2.bf16.msra.mxu0 0
      %621 = vmatprep.subr.bf16.mxu0 0
      %622 = vmatpush2.bf16.msra.mxu0 0
      %623 = vmatprep.subr.bf16.mxu0 0
      %624 = vmatpush2.bf16.msra.mxu0 0
      %625 = vmatprep.subr.bf16.mxu0 0
      %626 = vmatpush2.bf16.msra.mxu0 0
      %627 = vmatprep.mubr.bf16.mxu0 0
      %628 = vmatmul.mubr.bf16.gmra.mxu0 %v589
      %v629 = vpop.f32.mrf.mxu0
      %v630 = vadd.f32 0.0, %v629
      %v631 = vpop.f32.mrf.mxu0
      %v632 = vpop.f32.mrf.mxu0
      %v633 = vpop.f32.mrf.mxu0
      %634 = vdwg.mxu0
      %v636 = vsel %vm306, %v585, 0
      %v639 = vsel %vm591, %v303, 0
      %641 = vmatprep.subr.bf16.mxu0 0
      %642 = vmatpush1.bf16.msra.mxu0 0
      %643 = vmatprep.subr.bf16.mxu0 0
      %644 = vmatpush1.bf16.msra.mxu0 0
      %645 = vmatprep.subr.bf16.mxu0 0
      %646 = vmatpush1.bf16.msra.mxu0 0
      %647 = vmatprep.subr.bf16.mxu0 0
      %648 = vmatpush1.bf16.msra.mxu0 0
      %649 = vmatprep.subr.bf16.mxu0 0
      %650 = vmatpush1.bf16.msra.mxu0 0
      %651 = vmatprep.subr.bf16.mxu0 0
      %652 = vmatpush1.bf16.msra.mxu0 0
      %653 = vmatprep.subr.bf16.mxu0 0
      %654 = vmatpush1.bf16.msra.mxu0 0
      %655 = vmatprep.subr.bf16.mxu0 0
      %656 = vmatpush1.bf16.msra.mxu0 %v639
      %657 = vmatprep.subr.bf16.mxu0 0
      %658 = vmatpush2.bf16.msra.mxu0 0
      %659 = vmatprep.subr.bf16.mxu0 0
      %660 = vmatpush2.bf16.msra.mxu0 0
      %661 = vmatprep.subr.bf16.mxu0 0
      %662 = vmatpush2.bf16.msra.mxu0 0
      %663 = vmatprep.subr.bf16.mxu0 0
      %664 = vmatpush2.bf16.msra.mxu0 0
      %665 = vmatprep.subr.bf16.mxu0 0
      %666 = vmatpush2.bf16.msra.mxu0 0
      %667 = vmatprep.subr.bf16.mxu0 0
      %668 = vmatpush2.bf16.msra.mxu0 0
      %669 = vmatprep.subr.bf16.mxu0 0
      %670 = vmatpush2.bf16.msra.mxu0 0
      %671 = vmatprep.subr.bf16.mxu0 0
      %672 = vmatpush2.bf16.msra.mxu0 0
      %673 = vmatprep.mubr.bf16.mxu0 0
      %674 = vmatmul.mubr.bf16.gmra.mxu0 %v636
      %v675 = vpop.f32.mrf.mxu0
      %v676 = vadd.f32 0.0, %v675
      %v677 = vpop.f32.mrf.mxu0
      %v678 = vpop.f32.mrf.mxu0
      %v679 = vpop.f32.mrf.mxu0
      %680 = vdwg.mxu0
      %v682 = vsel %vm306, %v586, 0
      %v685 = vsel %vm591, %v304, 0
      %687 = vmatprep.subr.bf16.mxu0 0
      %688 = vmatpush1.bf16.msra.mxu0 0
      %689 = vmatprep.subr.bf16.mxu0 0
      %690 = vmatpush1.bf16.msra.mxu0 0
      %691 = vmatprep.subr.bf16.mxu0 0
      %692 = vmatpush1.bf16.msra.mxu0 0
      %693 = vmatprep.subr.bf16.mxu0 0
      %694 = vmatpush1.bf16.msra.mxu0 0
      %695 = vmatprep.subr.bf16.mxu0 0
      %696 = vmatpush1.bf16.msra.mxu0 0
      %697 = vmatprep.subr.bf16.mxu0 0
      %698 = vmatpush1.bf16.msra.mxu0 0
      %699 = vmatprep.subr.bf16.mxu0 0
      %700 = vmatpush1.bf16.msra.mxu0 0
      %701 = vmatprep.subr.bf16.mxu0 0
      %702 = vmatpush1.bf16.msra.mxu0 %v685
      %703 = vmatprep.subr.bf16.mxu0 0
      %704 = vmatpush2.bf16.msra.mxu0 0
      %705 = vmatprep.subr.bf16.mxu0 0
      %706 = vmatpush2.bf16.msra.mxu0 0
      %707 = vmatprep.subr.bf16.mxu0 0
      %708 = vmatpush2.bf16.msra.mxu0 0
      %709 = vmatprep.subr.bf16.mxu0 0
      %710 = vmatpush2.bf16.msra.mxu0 0
      %711 = vmatprep.subr.bf16.mxu0 0
      %712 = vmatpush2.bf16.msra.mxu0 0
      %713 = vmatprep.subr.bf16.mxu0 0
      %714 = vmatpush2.bf16.msra.mxu0 0
      %715 = vmatprep.subr.bf16.mxu0 0
      %716 = vmatpush2.bf16.msra.mxu0 0
      %717 = vmatprep.subr.bf16.mxu0 0
      %718 = vmatpush2.bf16.msra.mxu0 0
      %719 = vmatprep.mubr.bf16.mxu0 0
      %720 = vmatmul.mubr.bf16.gmra.mxu0 %v682
      %v721 = vpop.f32.mrf.mxu0
      %v722 = vadd.f32 0.0, %v721
      %v723 = vpop.f32.mrf.mxu0
      %v724 = vpop.f32.mrf.mxu0
      %v725 = vpop.f32.mrf.mxu0
      %726 = vdwg.mxu0
      %v728 = vsel %vm306, %v587, 0
      %v731 = vsel %vm591, %v305, 0
      %733 = vmatprep.subr.bf16.mxu0 0
      %734 = vmatpush1.bf16.msra.mxu0 0
      %735 = vmatprep.subr.bf16.mxu0 0
      %736 = vmatpush1.bf16.msra.mxu0 0
      %737 = vmatprep.subr.bf16.mxu0 0
      %738 = vmatpush1.bf16.msra.mxu0 0
      %739 = vmatprep.subr.bf16.mxu0 0
      %740 = vmatpush1.bf16.msra.mxu0 0
      %741 = vmatprep.subr.bf16.mxu0 0
      %742 = vmatpush1.bf16.msra.mxu0 0
      %743 = vmatprep.subr.bf16.mxu0 0
      %744 = vmatpush1.bf16.msra.mxu0 0
      %745 = vmatprep.subr.bf16.mxu0 0
      %746 = vmatpush1.bf16.msra.mxu0 0
      %747 = vmatprep.subr.bf16.mxu0 0
      %748 = vmatpush1.bf16.msra.mxu0 %v731
      %749 = vmatprep.subr.bf16.mxu0 0
      %750 = vmatpush2.bf16.msra.mxu0 0
      %751 = vmatprep.subr.bf16.mxu0 0
      %752 = vmatpush2.bf16.msra.mxu0 0
      %753 = vmatprep.subr.bf16.mxu0 0
      %754 = vmatpush2.bf16.msra.mxu0 0
      %755 = vmatprep.subr.bf16.mxu0 0
      %756 = vmatpush2.bf16.msra.mxu0 0
      %757 = vmatprep.subr.bf16.mxu0 0
      %758 = vmatpush2.bf16.msra.mxu0 0
      %759 = vmatprep.subr.bf16.mxu0 0
      %760 = vmatpush2.bf16.msra.mxu0 0
      %761 = vmatprep.subr.bf16.mxu0 0
      %762 = vmatpush2.bf16.msra.mxu0 0
      %763 = vmatprep.subr.bf16.mxu0 0
      %764 = vmatpush2.bf16.msra.mxu0 0
      %765 = vmatprep.mubr.bf16.mxu0 0
      %766 = vmatmul.mubr.bf16.gmra.mxu0 %v728
      %v767 = vpop.f32.mrf.mxu0
      %v768 = vadd.f32 0.0, %v767
      %v769 = vpop.f32.mrf.mxu0
      %v770 = vpop.f32.mrf.mxu0
      %v771 = vpop.f32.mrf.mxu0
      %772 = vdwg.mxu0
      %v773 = vld [vmem:[#allocation4] sm:$0xff]
      %v774 = vld [vmem:[#allocation4 + $0x8] sm:$0xff]
      %v775 = vld [vmem:[#allocation4 + $0x10] sm:$0xff]
      %v776 = vld [vmem:[#allocation4 + $0x18] sm:$0xff]
      %778 = vset.pattern.permute.xlu0 0
      %779 = vperm.xlu0 %778, %v516
      %v780 = vpop.permute.xlu0 %779
      %783 = vset.pattern.permute.xlu0 0
      %784 = vperm.xlu0 %783, %v518
      %v785 = vpop.permute.xlu0 %784
      %788 = vset.pattern.permute.xlu0 0
      %789 = vperm.xlu0 %788, %v520
      %v790 = vpop.permute.xlu0 %789
      %793 = vset.pattern.permute.xlu0 0
      %794 = vperm.xlu0 %793, %v522
      %v795 = vpop.permute.xlu0 %794
      %v797 = vmul.f32 %v780, %v773
      %v798 = vmul.f32 %v785, %v774
      %v799 = vmul.f32 %v790, %v775
      %v800 = vmul.f32 %v795, %v776
      %v801 = vadd.f32 %v797, %v630
      %v802 = vadd.f32 %v798, %v676
      %v803 = vadd.f32 %v799, %v722
      %v804 = vadd.f32 %v800, %v768
      %805 = vst.msk [vmem:[#allocation4] sm:$0xff] %vm306, %v801
      %806 = vst.msk [vmem:[#allocation4 + $0x8] sm:$0xff] %vm306, %v802
      %807 = vst.msk [vmem:[#allocation4 + $0x10] sm:$0xff] %vm306, %v803
      %808 = vst.msk [vmem:[#allocation4 + $0x18] sm:$0xff] %vm306, %v804
      %809 = vst.msk [vmem:[#allocation2] sm:$0xff] %vm579, %v507
      %810 = vst.msk [vmem:[#allocation2 + $0x8] sm:$0xff] %vm579, %v508
      %811 = vst.msk [vmem:[#allocation2 + $0x10] sm:$0xff] %vm579, %v509
      %812 = vst.msk [vmem:[#allocation2 + $0x18] sm:$0xff] %vm579, %v510
      // Predicated region
      $region37: #{multi_head_attention.4} parent=31 // pred_check
        %p813 = pneg %p276
      $region38: #{multi_head_attention.4} parent=31 // pred_check_branch
        %815 = sbr.rel (%p813) target = $region40
      $region39: #{multi_head_attention.4} parent=31 // pred_region
        %v816 = vld [vmem:[#allocation3] sm:$0xff]
        %v817 = vrcp.pop %v816
        %v818 = vmul.f32 %v817, 0.17677669
        %v819 = vld [vmem:[#allocation4] sm:$0xff]
        %821 = vset.pattern.permute.xlu0 0
        %822 = vperm.xlu0 %821, %v818
        %v823 = vpop.permute.xlu0 %822
        %v825 = vmul.f32 %v819, %v823
        %v826 = vpack.c.bf16 %v825, %v825
        %vm827 = vcmask 60416
        %828 = vst.msk [vmem:[%s274] sm:$0xf] %vm827, %v826
        %s829 = scalar_lea.vmem [#allocation3], 8
        %v830 = vld [vmem:[%s829] sm:$0xff]
        %v831 = vrcp.pop %v830
        %v832 = vmul.f32 %v831, 0.17677669
        %s833 = scalar_lea.vmem [#allocation4], 8
        %v834 = vld [vmem:[%s833] sm:$0xff]
        %836 = vset.pattern.permute.xlu0 0
        %837 = vperm.xlu0 %836, %v832
        %v838 = vpop.permute.xlu0 %837
        %v840 = vmul.f32 %v834, %v838
        %v841 = vpack.c.bf16 %v840, %v840
        %v843 = vunpack.c.l.b16 %v841
        %v844 = vpack.c.b16 %v843, %v843
        %845 = vrot.lane.b32.xlu0 %v844, 8
        %v846 = vpop.permute.xlu0 %845
        %vm848 = vcmask 126016
        %849 = vst.msk [vmem:[%s274] sm:$0xf] %vm848, %v846
        %s850 = scalar_lea.vmem [#allocation3], 16
        %v851 = vld [vmem:[%s850] sm:$0xff]
        %v852 = vrcp.pop %v851
        %v853 = vmul.f32 %v852, 0.17677669
        %s854 = scalar_lea.vmem [#allocation4], 16
        %v855 = vld [vmem:[%s854] sm:$0xff]
        %857 = vset.pattern.permute.xlu0 0
        %858 = vperm.xlu0 %857, %v853
        %v859 = vpop.permute.xlu0 %858
        %v861 = vmul.f32 %v855, %v859
        %v862 = vpack.c.bf16 %v861, %v861
        %v864 = vunpack.c.l.b16 %v862
        %v865 = vpack.c.b16 %v864, %v864
        %866 = vrot.lane.b32.xlu0 %v865, 16
        %v867 = vpop.permute.xlu0 %866
        %vm869 = vcmask 191616
        %870 = vst.msk [vmem:[%s274] sm:$0xf] %vm869, %v867
        %s871 = scalar_lea.vmem [#allocation3], 24
        %v872 = vld [vmem:[%s871] sm:$0xff]
        %v873 = vrcp.pop %v872
        %v874 = vmul.f32 %v873, 0.17677669
        %s875 = scalar_lea.vmem [#allocation4], 24
        %v876 = vld [vmem:[%s875] sm:$0xff]
        %878 = vset.pattern.permute.xlu0 0
        %879 = vperm.xlu0 %878, %v874
        %v880 = vpop.permute.xlu0 %879
        %v882 = vmul.f32 %v876, %v880
        %v883 = vpack.c.bf16 %v882, %v882
        %v885 = vunpack.c.l.b16 %v883
        %v886 = vpack.c.b16 %v885, %v885
        %887 = vrot.lane.b32.xlu0 %v886, 24
        %v888 = vpop.permute.xlu0 %887
        %vm890 = vcmask 257216
        %891 = vst.msk [vmem:[%s274] sm:$0xf] %vm890, %v888
      $region40: #{multi_head_attention.4} parent=31 // pred_fallthru
        _
      %p892 = scmp.lt.s32.totalorder %s19, 1
      %s893 = scalar_select %p892, %s19, 1
      %p894 = scmp.lt.s32.totalorder %s20, 0
      %s895 = scalar_select %p894, %s20, 0
      %s896 = sadd.s32 %s895, %s893
      %s897 = smul.addr %s896, 4
      %s898 = scalar_lea.vmem %s3, %s897
      // Predicated region
      $region41: #{multi_head_attention.4} parent=31 // pred_check
        %p899 = pneg %p137
      $region42: #{multi_head_attention.4} parent=31 // pred_check_branch
        %901 = sbr.rel (%p899) target = $region44
      $region43: #{multi_head_attention.4} parent=31 // pred_region
        _
      $region44: #{multi_head_attention.4} parent=31 // pred_fallthru
        _
    $region32: #{multi_head_attention.4} parent=5 // pred_fallthru
      _
    %p902 = scmp.le.s32.totalorder 2, %s9
    // Predicated region
    $region45: #{multi_head_attention.4} parent=5 // pred_check
      %p903 = pneg %p902
    $region46: #{multi_head_attention.4} parent=5 // pred_check_branch
      %905 = sbr.rel (%p903) target = $region48
    $region47: #{multi_head_attention.4} parent=5 // pred_region
      %s906 = ssub.s32 %s9, 2
      // Predicated region
      $region49: #{multi_head_attention.4} parent=47 // pred_check
        %p907 = pneg %p143
      $region50: #{multi_head_attention.4} parent=47 // pred_check_branch
        %909 = sbr.rel (%p907) target = $region52
      $region51: #{multi_head_attention.4} parent=47 // pred_region
        %p910 = scmp.lt.s32.totalorder %s22, 1
        %s911 = scalar_select %p910, %s22, 1
        %p912 = scmp.lt.s32.totalorder %s23, 0
        %s913 = scalar_select %p912, %s23, 0
        %s914 = sadd.s32 %s913, %s911
        %s915 = smul.addr %s914, 4
        %s916 = scalar_lea.vmem %s3, %s915
      $region52: #{multi_head_attention.4} parent=47 // pred_fallthru
        _
    $region48: #{multi_head_attention.4} parent=5 // pred_fallthru
      _
  $region6: #{multi_head_attention.4} parent=0 // loop_footer
    %s13 = sadd.s32 1, %s9
  $region7: #{multi_head_attention.4} parent=0 // loop_footer_branch
    %8 = sbr.rel target = $region3
  $region8: #{multi_head_attention.4} parent=0 // loop_exit
    _

</llo_original>
